<compile_context>
chip_gen: v6e
topology: v6e:2x2x1
jax: 0.10.0
libtpu: 0.0.40
codegen_flags: <defaults>
</compile_context>

<pallas_src>
import functools

import jax
import jax.numpy as jnp
from jax import lax
from jax.experimental import pallas as pl
from jax.experimental.pallas import tpu as pltpu


def _coattention_kernel(e_ref, q_ref, we_ref, g_ref,
                        w1a_ref, w1b_ref, w2a_ref, w2b_ref,
                        out1_ref, out2_ref,
                        corr_ref, acc_ref, l_ref, m_ref,
                        *, c, mm_dtype):
    jt = pl.program_id(1)
    n_jt = pl.num_programs(1)
    f32 = jnp.float32
    tiny = f32(1e-30)

    E = e_ref[...]            # (c, hw)  exemplar (input_1), full spatial extent
    Qj = q_ref[...]           # (c, tq)  query (input_2), current hw_q tile
    hw = E.shape[1]
    tq = Qj.shape[1]

    # ---- per-batch-element init (first query tile) ----------------------------
    @pl.when(jt == 0)
    def _init():
        # exemplar_corr = linear_e(exemplar^T):  corr[i, k] = sum_c E[c, i] * We[k, c]
        # (2-D weight stays MXU-stationary; cached across all query tiles)
        corr_ref[...] = lax.dot_general(
            E, we_ref[...],
            dimension_numbers=(((0,), (1,)), ((), ())),
            preferred_element_type=f32)                       # (hw, c)
        m_ref[...] = jnp.full_like(m_ref, -jnp.inf)
        l_ref[...] = jnp.zeros_like(l_ref)
        acc_ref[...] = jnp.zeros_like(acc_ref)

    # ---- scores for this tile: A_t[i, j] = sum_k corr[i, k] * Q[k, j] ----------
    # TODO(synk): on v7x the A matmul could also be fed in bf16 (only full-rate MXU
    # path there); kept f32 because A feeds exp() and sets the accuracy baseline.
    A_t = jnp.dot(corr_ref[...], Qj, preferred_element_type=f32)      # (hw, tq)

    # ---- shared-exp online-softmax bookkeeping (one exp serves both softmaxes) --
    m_old = m_ref[...]                                                 # (1, 1)
    t_max = jnp.max(jnp.max(A_t, axis=1, keepdims=True), axis=0, keepdims=True)
    m_new = jnp.maximum(m_old, t_max)
    alpha = jnp.exp(m_old - m_new)          # rescale of already-accumulated history
    EA = jnp.exp(A_t - m_new)                                          # (hw, tq) f32
    EA_mm = EA.astype(mm_dtype)             # bf16 operand feed, f32 accumulation

    # ---- query branch (softmax over i is complete within this tile -> exact) ---
    # Fold the column-sum into the matmul via an appended ones row (review item):
    # no separate ones-matvec / score-reduce pass.
    E_aug = jnp.concatenate(
        [E.astype(mm_dtype), jnp.ones((1, hw), dtype=mm_dtype)], axis=0)   # (c+1, hw)
    qa_aug = lax.dot_general(E_aug, EA_mm,
                             dimension_numbers=(((1,), (0,)), ((), ())),
                             preferred_element_type=f32)                   # (c+1, tq)
    col_sum = jnp.maximum(qa_aug[c:c + 1, :], tiny)   # clamp: shared-max underflow guard
    query_att = qa_aug[:c, :] * pl.reciprocal(col_sum)                     # (c, tq)

    g = g_ref[...]                                                         # (c, 1)
    mask2 = jax.nn.sigmoid(jnp.sum(query_att * g, axis=0, keepdims=True))  # gate 1x1
    att2 = query_att * mask2
    out2 = (jnp.dot(w2a_ref[...], att2, preferred_element_type=f32)
            + jnp.dot(w2b_ref[...], Qj, preferred_element_type=f32))
    out2_ref[...] = out2.astype(out2_ref.dtype)

    # ---- exemplar branch (online accumulation over the query tiles) ------------
    Q_aug_mm = jnp.concatenate(
        [Qj, jnp.ones((1, tq), dtype=f32)], axis=0).astype(mm_dtype)       # (c+1, tq)
    if c >= 128:
        # Contract EA on its sublane axis, transpose only the small operand/result
        # (avoids a potential (hw x tq) XLU transpose of the scores; N=c+1 still
        # fills the MXU width at these channel counts).
        contrib = lax.dot_general(
            EA_mm, Q_aug_mm.T,
            dimension_numbers=(((1,), (0,)), ((), ())),
            preferred_element_type=f32).T                                  # (c+1, hw)
    else:
        # For small c the N=c+1 orientation wastes most MXU columns; keep the
        # full-width-N form and let Mosaic relayout the small (c+1, tq) operand.
        contrib = lax.dot_general(
            Q_aug_mm, EA_mm,
            dimension_numbers=(((1,), (1,)), ((), ())),
            preferred_element_type=f32)                                    # (c+1, hw)

    l_ref[...] = alpha * l_ref[...] + contrib[c:c + 1, :]
    acc_ref[...] = alpha * acc_ref[...] + contrib[:c, :]
    m_ref[...] = m_new

    # ---- finalize exemplar branch on the last query tile ------------------------
    @pl.when(jt == n_jt - 1)
    def _finalize():
        row_sum = jnp.maximum(l_ref[...], tiny)        # underflow guard
        exemplar_att = acc_ref[...] * pl.reciprocal(row_sum)               # (c, hw)
        mask1 = jax.nn.sigmoid(jnp.sum(exemplar_att * g, axis=0, keepdims=True))
        att1 = exemplar_att * mask1
        out1 = (jnp.dot(w1a_ref[...], att1, preferred_element_type=f32)
                + jnp.dot(w1b_ref[...], E, preferred_element_type=f32))
        out1_ref[...] = out1.astype(out1_ref.dtype)


def _vmem_capacity_bytes():
    """Per-TensorCore VMEM capacity (generation-aware, conservative fallback)."""
    try:
        return int(pltpu.get_tpu_info().vmem_capacity_bytes)
    except Exception:
        pass
    try:
        kind = jax.devices()[0].device_kind.lower()
    except Exception:
        kind = ""
    if any(tag in kind for tag in ("v4", "v5", "v6")):
        return 128 * 1024 * 1024            # v4 / v5e / v5p / v6e
    return 64 * 1024 * 1024                 # v7x and unknown: be conservative


def coattention(input_1, input_2, We, g, W1, W2, *,
                mm_dtype=jnp.bfloat16, tile_q=None, out_dtype=jnp.float32):
    b, c, h, w = input_1.shape
    hw = h * w
    E = input_1.reshape(b, c, hw).astype(jnp.float32)
    Q = input_2.reshape(b, c, hw).astype(jnp.float32)

    We = We.astype(jnp.float32)
    # Split the (c, 2c) final-conv weights into aligned (c, c) halves in JAX (free).
    W1 = W1.astype(jnp.float32)
    W2 = W2.astype(jnp.float32)
    W1a, W1b = W1[:, :c], W1[:, c:]
    W2a, W2b = W2[:, :c], W2[:, c:]
    g_col = g.astype(jnp.float32).reshape(c, 1)      # channel axis on sublanes

    # ---- generation-aware VMEM budget (~78% of capacity -> headroom left) -------
    cap = _vmem_capacity_bytes()
    vmem_limit = int(cap * 0.78)                     # ~50 MiB on v7x, ~100 MiB on v5e/v6e

    # ---- hw_q tile selection -----------------------------------------------------
    score_bytes_per_col = hw * (4 + 4 + (2 if mm_dtype == jnp.bfloat16 else 4))
    col_bytes = score_bytes_per_col + 4 * (4 * c)            # + q/out2 blocks (2x buffered)
    fixed_bytes = (4 * (4 * c * hw)                           # E / out1 blocks (2x buffered)
                   + 4 * (2 * c * hw + hw + 128)              # corr + acc + l + m scratch
                   + 4 * (5 * c * c + c))                     # weights
    if tile_q is not None:
        tq = int(tile_q)
        assert hw % tq == 0 and (tq == hw or tq % 128 == 0), "bad tile_q"
    else:
        budget = int(vmem_limit * 0.6)
        tq_cap = max(128, (budget - fixed_bytes) // max(col_bytes, 1))
        if hw <= tq_cap:
            tq = hw
        else:
            tq = 0
            cand = (tq_cap // 128) * 128
            while cand >= 128:
                if hw % cand == 0:
                    tq = cand
                    break
                cand -= 128
            if tq == 0:
                # TODO(synk): pad/mask the query axis so non-128-divisible hw can be tiled.
                tq = hw
    n_jt = hw // tq

    # ---- advisory cost estimate for XLA scheduling around the kernel ------------
    flops = int(b * (2 * hw * c * c               # corr = linear_e
                     + 2 * hw * hw * c            # A
                     + 2 * hw * hw * (c + 1) * 2  # two attended matmuls (+ folded sums)
                     + 2 * hw * c * c * 4))       # two final 1x1 convs (two halves each)
    transcendentals = int(b * (hw * hw + 2 * hw))
    bytes_accessed = int(16 * b * c * hw + 4 * (5 * c * c + c))

    kernel = functools.partial(_coattention_kernel, c=c, mm_dtype=mm_dtype)

    grid_spec = pltpu.PrefetchScalarGridSpec(
        num_scalar_prefetch=0,
        grid=(b, n_jt),
        in_specs=[
            pl.BlockSpec((None, c, hw), lambda ib, jt: (ib, 0, 0)),   # exemplar (full hw)
            pl.BlockSpec((None, c, tq), lambda ib, jt: (ib, 0, jt)),  # query tile
            pl.BlockSpec((c, c), lambda ib, jt: (0, 0)),              # W_e
            pl.BlockSpec((c, 1), lambda ib, jt: (0, 0)),              # gate weight
            pl.BlockSpec((c, c), lambda ib, jt: (0, 0)),              # W1 (att half)
            pl.BlockSpec((c, c), lambda ib, jt: (0, 0)),              # W1 (orig half)
            pl.BlockSpec((c, c), lambda ib, jt: (0, 0)),              # W2 (att half)
            pl.BlockSpec((c, c), lambda ib, jt: (0, 0)),              # W2 (orig half)
        ],
        out_specs=[
            pl.BlockSpec((None, c, hw), lambda ib, jt: (ib, 0, 0)),   # out1 (written last tile)
            pl.BlockSpec((None, c, tq), lambda ib, jt: (ib, 0, jt)),  # out2 (written per tile)
        ],
        scratch_shapes=[
            pltpu.VMEM((hw, c), jnp.float32),   # corr (linear_e(E^T)), cached per batch elem
            pltpu.VMEM((c, hw), jnp.float32),   # exemplar-branch numerator accumulator
            pltpu.VMEM((1, hw), jnp.float32),   # running row-sum
            pltpu.VMEM((1, 1), jnp.float32),    # running shared max
        ],
    )

    o1, o2 = pl.pallas_call(
        kernel,
        out_shape=(jax.ShapeDtypeStruct((b, c, hw), out_dtype),
                   jax.ShapeDtypeStruct((b, c, hw), out_dtype)),
        grid_spec=grid_spec,
        compiler_params=pltpu.CompilerParams(
            dimension_semantics=("parallel", "arbitrary"),
            vmem_limit_bytes=vmem_limit,
        ),
        cost_estimate=pl.CostEstimate(
            flops=flops,
            transcendentals=transcendentals,
            bytes_accessed=bytes_accessed,
        ),
    )(E, Q, We, g_col, W1a, W1b, W2a, W2b)
    return o1.reshape(b, c, h, w), o2.reshape(b, c, h, w)


def coattention_ref(x1, x2, We, g, W1, W2):
    """Pure-JAX reference mirroring the PyTorch forward exactly."""
    b, c, h, w = x1.shape
    hw = h * w
    E = x1.reshape(b, c, hw)
    Q = x2.reshape(b, c, hw)
    ET = jnp.swapaxes(E, 1, 2)                       # (b, hw, c)
    corr = jnp.einsum('bic,dc->bid', ET, We)         # linear_e (no bias)
    A = jnp.einsum('bic,bcj->bij', corr, Q)          # (b, hw, hw)
    A1 = jax.nn.softmax(A, axis=1)
    B = jax.nn.softmax(jnp.swapaxes(A, 1, 2), axis=1)
    query_att = jnp.einsum('bci,bij->bcj', E, A1)
    exemplar_att = jnp.einsum('bci,bij->bcj', Q, B)
    att1 = exemplar_att.reshape(b, c, h, w)
    att2 = query_att.reshape(b, c, h, w)
    m1 = jax.nn.sigmoid(jnp.einsum('oc,bchw->bohw', g, att1))
    m2 = jax.nn.sigmoid(jnp.einsum('oc,bchw->bohw', g, att2))
    att1 = att1 * m1
    att2 = att2 * m2
    cat1 = jnp.concatenate([att1, x1], axis=1)
    cat2 = jnp.concatenate([att2, x2], axis=1)
    out1 = jnp.einsum('ok,bkhw->bohw', W1, cat1)
    out2 = jnp.einsum('ok,bkhw->bohw', W2, cat2)
    return out1, out2


if __name__ == "__main__":
    key = jax.random.PRNGKey(0)
    k1, k2, k3, k4, k5, k6 = jax.random.split(key, 6)

    b, c, h, w = 2, 32, 16, 16

    x1 = jax.random.normal(k1, (b, c, h, w), dtype=jnp.float32)
    x2 = jax.random.normal(k2, (b, c, h, w), dtype=jnp.float32)

    # Deterministic synthetic parameters (conv weights ~ N(0, 0.01) like __init__).
    We = jax.random.normal(k3, (c, c), dtype=jnp.float32) * 0.05   # linear_e
    g = jax.random.normal(k4, (1, c), dtype=jnp.float32) * 0.01    # gate 1x1 conv
    W1 = jax.random.normal(k5, (c, 2 * c), dtype=jnp.float32) * 0.01
    W2 = jax.random.normal(k6, (c, 2 * c), dtype=jnp.float32) * 0.01

    ref1, ref2 = coattention_ref(x1, x2, We, g, W1, W2)

    # (1) f32 matmul path with a forced hw_q tiling -> exercises the online-softmax
    #     accumulation and checks the tight (1e-4) accuracy baseline.
    run_f32 = jax.jit(lambda *a: coattention(*a, mm_dtype=jnp.float32, tile_q=128))
    o1, o2 = run_f32(x1, x2, We, g, W1, W2)
    jax.block_until_ready((o1, o2))
    assert jnp.allclose(o1, ref1, rtol=1e-4, atol=1e-4), "f32 path: output 1 mismatch"
    assert jnp.allclose(o2, ref2, rtol=1e-4, atol=1e-4), "f32 path: output 2 mismatch"

    # (2) default fast path: bf16 operand feed for the hw^2 matmuls (f32 accumulation),
    #     auto hw_q tile from the generation-aware VMEM budget.
    run_fast = jax.jit(lambda *a: coattention(*a))
    f1, f2 = run_fast(x1, x2, We, g, W1, W2)
    jax.block_until_ready((f1, f2))
    assert jnp.allclose(f1, ref1, rtol=5e-2, atol=2e-2), "bf16 path: output 1 mismatch"
    assert jnp.allclose(f2, ref2, rtol=5e-2, atol=2e-2), "bf16 path: output 2 mismatch"

    print("KERNEL_OK")
</pallas_src>

<mosaic_0001>
module attributes {stable_mosaic.version = 11 : i64} {
  func.func @_coattention_kernel(%arg0: i32, %arg1: i32, %arg2: memref<1x32x256xf32, #tpu.memory_space<vmem>>, %arg3: memref<1x32x128xf32, #tpu.memory_space<vmem>>, %arg4: memref<32x32xf32, #tpu.memory_space<vmem>>, %arg5: memref<32x1xf32, #tpu.memory_space<vmem>>, %arg6: memref<32x32xf32, #tpu.memory_space<vmem>>, %arg7: memref<32x32xf32, #tpu.memory_space<vmem>>, %arg8: memref<32x32xf32, #tpu.memory_space<vmem>>, %arg9: memref<32x32xf32, #tpu.memory_space<vmem>>, %arg10: memref<1x32x256xf32, #tpu.memory_space<vmem>>, %arg11: memref<1x32x128xf32, #tpu.memory_space<vmem>>, %arg12: memref<256x32xf32, #tpu.memory_space<vmem>>, %arg13: memref<32x256xf32, #tpu.memory_space<vmem>>, %arg14: memref<1x256xf32, #tpu.memory_space<vmem>>, %arg15: memref<1x1xf32, #tpu.memory_space<vmem>>) attributes {dimension_semantics = [#tpu.dimension_semantics<parallel>, #tpu.dimension_semantics<arbitrary>], iteration_bounds = array<i64: 2, 2>, scalar_prefetch = 0 : i64, scratch_operands = 4 : i64, tpu.core_type = #tpu.core_type<tc>, window_params = [{transform_indices = @transform_0, window_bounds = array<i64: 1, 32, 256>}, {transform_indices = @transform_1, window_bounds = array<i64: 1, 32, 128>}, {pipeline_mode = #tpu.pipeline_mode<synchronous>, transform_indices = @transform_2, window_bounds = array<i64: 32, 32>}, {pipeline_mode = #tpu.pipeline_mode<synchronous>, transform_indices = @transform_3, window_bounds = array<i64: 32, 1>}, {pipeline_mode = #tpu.pipeline_mode<synchronous>, transform_indices = @transform_4, window_bounds = array<i64: 32, 32>}, {pipeline_mode = #tpu.pipeline_mode<synchronous>, transform_indices = @transform_5, window_bounds = array<i64: 32, 32>}, {pipeline_mode = #tpu.pipeline_mode<synchronous>, transform_indices = @transform_6, window_bounds = array<i64: 32, 32>}, {pipeline_mode = #tpu.pipeline_mode<synchronous>, transform_indices = @transform_7, window_bounds = array<i64: 32, 32>}, {transform_indices = @transform_8, window_bounds = array<i64: 1, 32, 256>}, {transform_indices = @transform_9, window_bounds = array<i64: 1, 32, 128>}]} {
    %c0 = arith.constant 0 : index
    %c0_0 = arith.constant 0 : index
    %c0_1 = arith.constant 0 : index
    %0 = vector.load %arg2[%c0, %c0_0, %c0_1] : memref<1x32x256xf32, #tpu.memory_space<vmem>>, vector<1x32x256xf32>
    %1 = vector.shape_cast %0 : vector<1x32x256xf32> to vector<32x256xf32>
    %c0_2 = arith.constant 0 : index
    %c0_3 = arith.constant 0 : index
    %c0_4 = arith.constant 0 : index
    %2 = vector.load %arg3[%c0_2, %c0_3, %c0_4] : memref<1x32x128xf32, #tpu.memory_space<vmem>>, vector<1x32x128xf32>
    %3 = vector.shape_cast %2 : vector<1x32x128xf32> to vector<32x128xf32>
    %c0_i32 = arith.constant 0 : i32
    %4 = arith.cmpi eq, %arg1, %c0_i32 : i32
    %5 = arith.extui %4 : i1 to i32
    %c0_i32_5 = arith.constant 0 : i32
    %6 = arith.cmpi ne, %5, %c0_i32_5 : i32
    scf.if %6 {
      %c0_42 = arith.constant 0 : index
      %c0_43 = arith.constant 0 : index
      %69 = vector.load %arg4[%c0_42, %c0_43] : memref<32x32xf32, #tpu.memory_space<vmem>>, vector<32x32xf32>
      %cst_44 = arith.constant dense<0.000000e+00> : vector<256x32xf32>
      %70 = tpu.matmul %1, %69, %cst_44 {dimension_numbers = #tpu.dot_dimension_numbers<[0], [1], [1], [0], [0, 1, 1, 0], [], []>} : vector<32x256xf32>, vector<32x32xf32>, vector<256x32xf32> -> vector<256x32xf32>
      %c0_45 = arith.constant 0 : index
      %c0_46 = arith.constant 0 : index
      %71 = vector.load %arg12[%c0_45, %c0_46] : memref<256x32xf32, #tpu.memory_space<vmem>>, vector<256x32xf32>
      tpu.vector_store %arg12[%c0_45, %c0_46], %70 {strides = array<i32>} : memref<256x32xf32, #tpu.memory_space<vmem>>, vector<256x32xf32>,
      %cst_47 = arith.constant 0xFF800000 : f32
      %72 = vector.broadcast %cst_47 : f32 to vector<1x1xf32>
      %c0_48 = arith.constant 0 : index
      %c0_49 = arith.constant 0 : index
      %73 = vector.load %arg15[%c0_48, %c0_49] : memref<1x1xf32, #tpu.memory_space<vmem>>, vector<1x1xf32>
      tpu.vector_store %arg15[%c0_48, %c0_49], %72 {strides = array<i32>} : memref<1x1xf32, #tpu.memory_space<vmem>>, vector<1x1xf32>,
      %cst_50 = arith.constant 0.000000e+00 : f32
      %74 = vector.broadcast %cst_50 : f32 to vector<1x256xf32>
      %c0_51 = arith.constant 0 : index
      %c0_52 = arith.constant 0 : index
      %75 = vector.load %arg14[%c0_51, %c0_52] : memref<1x256xf32, #tpu.memory_space<vmem>>, vector<1x256xf32>
      tpu.vector_store %arg14[%c0_51, %c0_52], %74 {strides = array<i32>} : memref<1x256xf32, #tpu.memory_space<vmem>>, vector<1x256xf32>,
      %cst_53 = arith.constant 0.000000e+00 : f32
      %76 = vector.broadcast %cst_53 : f32 to vector<32x256xf32>
      %c0_54 = arith.constant 0 : index
      %c0_55 = arith.constant 0 : index
      %77 = vector.load %arg13[%c0_54, %c0_55] : memref<32x256xf32, #tpu.memory_space<vmem>>, vector<32x256xf32>
      tpu.vector_store %arg13[%c0_54, %c0_55], %76 {strides = array<i32>} : memref<32x256xf32, #tpu.memory_space<vmem>>, vector<32x256xf32>,
    } else {
    }
    %c0_6 = arith.constant 0 : index
    %c0_7 = arith.constant 0 : index
    %7 = vector.load %arg12[%c0_6, %c0_7] : memref<256x32xf32, #tpu.memory_space<vmem>>, vector<256x32xf32>
    %cst = arith.constant dense<0.000000e+00> : vector<256x128xf32>
    %8 = tpu.matmul %7, %3, %cst {dimension_numbers = #tpu.dot_dimension_numbers<[1], [0], [0], [1], [0, 0, 1, 1], [], []>} : vector<256x32xf32>, vector<32x128xf32>, vector<256x128xf32> -> vector<256x128xf32>
    %c0_8 = arith.constant 0 : index
    %c0_9 = arith.constant 0 : index
    %9 = vector.load %arg15[%c0_8, %c0_9] : memref<1x1xf32, #tpu.memory_space<vmem>>, vector<1x1xf32>
    %cst_10 = arith.constant dense<0xFF800000> : vector<256xf32>
    %10 = vector.multi_reduction <maximumf>, %8, %cst_10 [1] : vector<256x128xf32> to vector<256xf32>
    %11 = vector.shape_cast %10 : vector<256xf32> to vector<256x1xf32>
    %cst_11 = arith.constant dense<0xFF800000> : vector<1xf32>
    %12 = vector.multi_reduction <maximumf>, %11, %cst_11 [0] : vector<256x1xf32> to vector<1xf32>
    %13 = vector.shape_cast %12 : vector<1xf32> to vector<1x1xf32>
    %14 = arith.maximumf %9, %13 : vector<1x1xf32>
    %15 = arith.subf %9, %14 : vector<1x1xf32>
    %16 = math.exp %15 : vector<1x1xf32>
    %17 = vector.broadcast %14 : vector<1x1xf32> to vector<256x128xf32>
    %18 = arith.subf %8, %17 : vector<256x128xf32>
    %19 = math.exp %18 : vector<256x128xf32>
    %cst_12 = arith.constant 1.000000e+00 : f32
    %20 = vector.broadcast %cst_12 : f32 to vector<1x256xf32>
    %21 = tpu.concatenate %1, %20 in 0 : vector<32x256xf32>, vector<1x256xf32> -> vector<33x256xf32>
    %cst_13 = arith.constant dense<0.000000e+00> : vector<33x128xf32>
    %22 = tpu.matmul %21, %19, %cst_13 {dimension_numbers = #tpu.dot_dimension_numbers<[1], [0], [0], [1], [0, 0, 1, 1], [], []>} : vector<33x256xf32>, vector<256x128xf32>, vector<33x128xf32> -> vector<33x128xf32>
    %23 = vector.extract_strided_slice %22 {offsets = [32, 0], sizes = [1, 128], strides = [1, 1]} : vector<33x128xf32> to vector<1x128xf32>
    %cst_14 = arith.constant 1.000000e-30 : f32
    %24 = vector.broadcast %cst_14 : f32 to vector<1x128xf32>
    %25 = arith.maximumf %23, %24 : vector<1x128xf32>
    %26 = vector.extract_strided_slice %22 {offsets = [0, 0], sizes = [32, 128], strides = [1, 1]} : vector<33x128xf32> to vector<32x128xf32>
    %27 = tpu.reciprocal %25 : vector<1x128xf32> -> vector<1x128xf32>
    %28 = vector.broadcast %27 : vector<1x128xf32> to vector<32x128xf32>
    %29 = arith.mulf %26, %28 : vector<32x128xf32>
    %c0_15 = arith.constant 0 : index
    %c0_16 = arith.constant 0 : index
    %30 = vector.load %arg5[%c0_15, %c0_16] : memref<32x1xf32, #tpu.memory_space<vmem>>, vector<32x1xf32>
    %31 = vector.broadcast %30 : vector<32x1xf32> to vector<32x128xf32>
    %32 = arith.mulf %29, %31 : vector<32x128xf32>
    %cst_17 = arith.constant dense<0.000000e+00> : vector<128xf32>
    %33 = vector.multi_reduction <add>, %32, %cst_17 [0] : vector<32x128xf32> to vector<128xf32>
    %34 = vector.shape_cast %33 : vector<128xf32> to vector<1x128xf32>
    %35 = arith.negf %34 : vector<1x128xf32>
    %36 = math.exp %35 : vector<1x128xf32>
    %cst_18 = arith.constant 1.000000e+00 : f32
    %37 = vector.broadcast %cst_18 : f32 to vector<1x128xf32>
    %38 = arith.addf %37, %36 : vector<1x128xf32>
    %39 = arith.divf %37, %38 : vector<1x128xf32>
    %40 = vector.broadcast %39 : vector<1x128xf32> to vector<32x128xf32>
    %41 = arith.mulf %29, %40 : vector<32x128xf32>
    %c0_19 = arith.constant 0 : index
    %c0_20 = arith.constant 0 : index
    %42 = vector.load %arg8[%c0_19, %c0_20] : memref<32x32xf32, #tpu.memory_space<vmem>>, vector<32x32xf32>
    %cst_21 = arith.constant dense<0.000000e+00> : vector<32x128xf32>
    %43 = tpu.matmul %42, %41, %cst_21 {dimension_numbers = #tpu.dot_dimension_numbers<[1], [0], [0], [1], [0, 0, 1, 1], [], []>} : vector<32x32xf32>, vector<32x128xf32>, vector<32x128xf32> -> vector<32x128xf32>
    %c0_22 = arith.constant 0 : index
    %c0_23 = arith.constant 0 : index
    %44 = vector.load %arg9[%c0_22, %c0_23] : memref<32x32xf32, #tpu.memory_space<vmem>>, vector<32x32xf32>
    %cst_24 = arith.constant dense<0.000000e+00> : vector<32x128xf32>
    %45 = tpu.matmul %44, %3, %cst_24 {dimension_numbers = #tpu.dot_dimension_numbers<[1], [0], [0], [1], [0, 0, 1, 1], [], []>} : vector<32x32xf32>, vector<32x128xf32>, vector<32x128xf32> -> vector<32x128xf32>
    %46 = arith.addf %43, %45 : vector<32x128xf32>
    %c0_25 = arith.constant 0 : index
    %c0_26 = arith.constant 0 : index
    %c0_27 = arith.constant 0 : index
    %47 = vector.load %arg11[%c0_25, %c0_26, %c0_27] : memref<1x32x128xf32, #tpu.memory_space<vmem>>, vector<1x32x128xf32>
    %48 = vector.shape_cast %47 : vector<1x32x128xf32> to vector<32x128xf32>
    %49 = vector.shape_cast %46 : vector<32x128xf32> to vector<1x32x128xf32>
    tpu.vector_store %arg11[%c0_25, %c0_26, %c0_27], %49 {strides = array<i32>} : memref<1x32x128xf32, #tpu.memory_space<vmem>>, vector<1x32x128xf32>,
    %cst_28 = arith.constant 1.000000e+00 : f32
    %50 = vector.broadcast %cst_28 : f32 to vector<1x128xf32>
    %51 = tpu.concatenate %3, %50 in 0 : vector<32x128xf32>, vector<1x128xf32> -> vector<33x128xf32>
    %cst_29 = arith.constant dense<0.000000e+00> : vector<33x256xf32>
    %52 = tpu.matmul %51, %19, %cst_29 {dimension_numbers = #tpu.dot_dimension_numbers<[1], [1], [0], [0], [0, 0, 1, 0], [], []>} : vector<33x128xf32>, vector<256x128xf32>, vector<33x256xf32> -> vector<33x256xf32>
    %c0_30 = arith.constant 0 : index
    %c0_31 = arith.constant 0 : index
    %53 = vector.load %arg14[%c0_30, %c0_31] : memref<1x256xf32, #tpu.memory_space<vmem>>, vector<1x256xf32>
    %54 = vector.broadcast %16 : vector<1x1xf32> to vector<1x256xf32>
    %55 = arith.mulf %54, %53 : vector<1x256xf32>
    %56 = vector.extract_strided_slice %52 {offsets = [32, 0], sizes = [1, 256], strides = [1, 1]} : vector<33x256xf32> to vector<1x256xf32>
    %57 = arith.addf %55, %56 : vector<1x256xf32>
    %c0_32 = arith.constant 0 : index
    %c0_33 = arith.constant 0 : index
    %58 = vector.load %arg14[%c0_32, %c0_33] : memref<1x256xf32, #tpu.memory_space<vmem>>, vector<1x256xf32>
    tpu.vector_store %arg14[%c0_32, %c0_33], %57 {strides = array<i32>} : memref<1x256xf32, #tpu.memory_space<vmem>>, vector<1x256xf32>,
    %c0_34 = arith.constant 0 : index
    %c0_35 = arith.constant 0 : index
    %59 = vector.load %arg13[%c0_34, %c0_35] : memref<32x256xf32, #tpu.memory_space<vmem>>, vector<32x256xf32>
    %60 = vector.broadcast %16 : vector<1x1xf32> to vector<32x256xf32>
    %61 = arith.mulf %60, %59 : vector<32x256xf32>
    %62 = vector.extract_strided_slice %52 {offsets = [0, 0], sizes = [32, 256], strides = [1, 1]} : vector<33x256xf32> to vector<32x256xf32>
    %63 = arith.addf %61, %62 : vector<32x256xf32>
    %c0_36 = arith.constant 0 : index
    %c0_37 = arith.constant 0 : index
    %64 = vector.load %arg13[%c0_36, %c0_37] : memref<32x256xf32, #tpu.memory_space<vmem>>, vector<32x256xf32>
    tpu.vector_store %arg13[%c0_36, %c0_37], %63 {strides = array<i32>} : memref<32x256xf32, #tpu.memory_space<vmem>>, vector<32x256xf32>,
    %c0_38 = arith.constant 0 : index
    %c0_39 = arith.constant 0 : index
    %65 = vector.load %arg15[%c0_38, %c0_39] : memref<1x1xf32, #tpu.memory_space<vmem>>, vector<1x1xf32>
    tpu.vector_store %arg15[%c0_38, %c0_39], %14 {strides = array<i32>} : memref<1x1xf32, #tpu.memory_space<vmem>>, vector<1x1xf32>,
    %c1_i32 = arith.constant 1 : i32
    %66 = arith.cmpi eq, %arg1, %c1_i32 : i32
    %67 = arith.extui %66 : i1 to i32
    %cst_40 = arith.constant 1.000000e-30 : f32
    %c0_i32_41 = arith.constant 0 : i32
    %68 = arith.cmpi ne, %67, %c0_i32_41 : i32
    scf.if %68 {
      %c0_42 = arith.constant 0 : index
      %c0_43 = arith.constant 0 : index
      %69 = vector.load %arg14[%c0_42, %c0_43] : memref<1x256xf32, #tpu.memory_space<vmem>>, vector<1x256xf32>
      %70 = vector.broadcast %cst_40 : f32 to vector<1x256xf32>
      %71 = arith.maximumf %69, %70 : vector<1x256xf32>
      %c0_44 = arith.constant 0 : index
      %c0_45 = arith.constant 0 : index
      %72 = vector.load %arg13[%c0_44, %c0_45] : memref<32x256xf32, #tpu.memory_space<vmem>>, vector<32x256xf32>
      %73 = tpu.reciprocal %71 : vector<1x256xf32> -> vector<1x256xf32>
      %74 = vector.broadcast %73 : vector<1x256xf32> to vector<32x256xf32>
      %75 = arith.mulf %72, %74 : vector<32x256xf32>
      %76 = vector.broadcast %30 : vector<32x1xf32> to vector<32x256xf32>
      %77 = arith.mulf %75, %76 : vector<32x256xf32>
      %cst_46 = arith.constant dense<0.000000e+00> : vector<256xf32>
      %78 = vector.multi_reduction <add>, %77, %cst_46 [0] : vector<32x256xf32> to vector<256xf32>
      %79 = vector.shape_cast %78 : vector<256xf32> to vector<1x256xf32>
      %80 = arith.negf %79 : vector<1x256xf32>
      %81 = math.exp %80 : vector<1x256xf32>
      %cst_47 = arith.constant 1.000000e+00 : f32
      %82 = vector.broadcast %cst_47 : f32 to vector<1x256xf32>
      %83 = arith.addf %82, %81 : vector<1x256xf32>
      %84 = arith.divf %82, %83 : vector<1x256xf32>
      %85 = vector.broadcast %84 : vector<1x256xf32> to vector<32x256xf32>
      %86 = arith.mulf %75, %85 : vector<32x256xf32>
      %c0_48 = arith.constant 0 : index
      %c0_49 = arith.constant 0 : index
      %87 = vector.load %arg6[%c0_48, %c0_49] : memref<32x32xf32, #tpu.memory_space<vmem>>, vector<32x32xf32>
      %cst_50 = arith.constant dense<0.000000e+00> : vector<32x256xf32>
      %88 = tpu.matmul %87, %86, %cst_50 {dimension_numbers = #tpu.dot_dimension_numbers<[1], [0], [0], [1], [0, 0, 1, 1], [], []>} : vector<32x32xf32>, vector<32x256xf32>, vector<32x256xf32> -> vector<32x256xf32>
      %c0_51 = arith.constant 0 : index
      %c0_52 = arith.constant 0 : index
      %89 = vector.load %arg7[%c0_51, %c0_52] : memref<32x32xf32, #tpu.memory_space<vmem>>, vector<32x32xf32>
      %cst_53 = arith.constant dense<0.000000e+00> : vector<32x256xf32>
      %90 = tpu.matmul %89, %1, %cst_53 {dimension_numbers = #tpu.dot_dimension_numbers<[1], [0], [0], [1], [0, 0, 1, 1], [], []>} : vector<32x32xf32>, vector<32x256xf32>, vector<32x256xf32> -> vector<32x256xf32>
      %91 = arith.addf %88, %90 : vector<32x256xf32>
      %c0_54 = arith.constant 0 : index
      %c0_55 = arith.constant 0 : index
      %c0_56 = arith.constant 0 : index
      %92 = vector.load %arg10[%c0_54, %c0_55, %c0_56] : memref<1x32x256xf32, #tpu.memory_space<vmem>>, vector<1x32x256xf32>
      %93 = vector.shape_cast %92 : vector<1x32x256xf32> to vector<32x256xf32>
      %94 = vector.shape_cast %91 : vector<32x256xf32> to vector<1x32x256xf32>
      tpu.vector_store %arg10[%c0_54, %c0_55, %c0_56], %94 {strides = array<i32>} : memref<1x32x256xf32, #tpu.memory_space<vmem>>, vector<1x32x256xf32>,
    } else {
    }
    return
  }
  func.func @transform_0(%arg0: i32, %arg1: i32) -> (i32, i32, i32) {
    %c0_i32 = arith.constant 0 : i32
    %c0_i32_0 = arith.constant 0 : i32
    %c0_i32_1 = arith.constant 0 : i32
    return %arg0, %c0_i32, %c0_i32_0 : i32, i32, i32
  }
  func.func @transform_1(%arg0: i32, %arg1: i32) -> (i32, i32, i32) {
    %c0_i32 = arith.constant 0 : i32
    %c0_i32_0 = arith.constant 0 : i32
    return %arg0, %c0_i32, %arg1 : i32, i32, i32
  }
  func.func @transform_2(%arg0: i32, %arg1: i32) -> (i32, i32) {
    %c0_i32 = arith.constant 0 : i32
    %c0_i32_0 = arith.constant 0 : i32
    %c0_i32_1 = arith.constant 0 : i32
    return %c0_i32, %c0_i32_0 : i32, i32
  }
  func.func @transform_3(%arg0: i32, %arg1: i32) -> (i32, i32) {
    %c0_i32 = arith.constant 0 : i32
    %c0_i32_0 = arith.constant 0 : i32
    %c0_i32_1 = arith.constant 0 : i32
    return %c0_i32, %c0_i32_0 : i32, i32
  }
  func.func @transform_4(%arg0: i32, %arg1: i32) -> (i32, i32) {
    %c0_i32 = arith.constant 0 : i32
    %c0_i32_0 = arith.constant 0 : i32
    %c0_i32_1 = arith.constant 0 : i32
    return %c0_i32, %c0_i32_0 : i32, i32
  }
  func.func @transform_5(%arg0: i32, %arg1: i32) -> (i32, i32) {
    %c0_i32 = arith.constant 0 : i32
    %c0_i32_0 = arith.constant 0 : i32
    %c0_i32_1 = arith.constant 0 : i32
    return %c0_i32, %c0_i32_0 : i32, i32
  }
  func.func @transform_6(%arg0: i32, %arg1: i32) -> (i32, i32) {
    %c0_i32 = arith.constant 0 : i32
    %c0_i32_0 = arith.constant 0 : i32
    %c0_i32_1 = arith.constant 0 : i32
    return %c0_i32, %c0_i32_0 : i32, i32
  }
  func.func @transform_7(%arg0: i32, %arg1: i32) -> (i32, i32) {
    %c0_i32 = arith.constant 0 : i32
    %c0_i32_0 = arith.constant 0 : i32
    %c0_i32_1 = arith.constant 0 : i32
    return %c0_i32, %c0_i32_0 : i32, i32
  }
  func.func @transform_8(%arg0: i32, %arg1: i32) -> (i32, i32, i32) {
    %c0_i32 = arith.constant 0 : i32
    %c0_i32_0 = arith.constant 0 : i32
    %c0_i32_1 = arith.constant 0 : i32
    return %arg0, %c0_i32, %c0_i32_0 : i32, i32, i32
  }
  func.func @transform_9(%arg0: i32, %arg1: i32) -> (i32, i32, i32) {
    %c0_i32 = arith.constant 0 : i32
    %c0_i32_0 = arith.constant 0 : i32
    return %arg0, %c0_i32, %arg1 : i32, i32, i32
  }
}

</mosaic_0001>

<llo_original>
// kernel: _lambda_.1
$region0: #{_lambda_.1}
  #allocation0 [shape = 'u32[]', space=smem, size = 0x4, offset = 0x4, fixed_abs, tag = 'smem constant byte address 0x4 - core index']
  #allocation1 [shape = 'u32[144,128]{1,0:T(1,128)}', space=vmem, size = 0x12000, scoped, tag = 'internal scratch']
  #allocation2 [shape = 'f32[256,32]{1,0:T(8,128)}', space=vmem, size = 0x20000, scoped, tag = 'scratch operand']
  #allocation3 [shape = 'f32[32,256]{1,0:T(8,128)}', space=vmem, size = 0x8000, scoped, tag = 'scratch operand']
  #allocation4 [shape = 'f32[1,256]{1,0:T(1,128)}', space=vmem, size = 0x400, scoped, tag = 'scratch operand']
  #allocation5 [shape = 'f32[1,1]{1,0:T(1,128)}', space=vmem, size = 0x200, scoped, tag = 'scratch operand']
  %s0 = inlined_call_operand.vmem [shape: f32[2,32,256], index: 0, kind: input, shape index: {}]
  %s1 = inlined_call_operand.vmem [shape: f32[2,32,256], index: 1, kind: input, shape index: {}]
  %s2 = inlined_call_operand.vmem [shape: f32[32,32], index: 2, kind: input, shape index: {}]
  %s3 = inlined_call_operand.vmem [shape: f32[32,1], index: 3, kind: input, shape index: {}]
  %s4 = inlined_call_operand.vmem [shape: f32[32,32], index: 4, kind: input, shape index: {}]
  %s5 = inlined_call_operand.vmem [shape: f32[32,32], index: 5, kind: input, shape index: {}]
  %s6 = inlined_call_operand.vmem [shape: f32[32,32], index: 6, kind: input, shape index: {}]
  %s7 = inlined_call_operand.vmem [shape: f32[32,32], index: 7, kind: input, shape index: {}]
  %s8 = inlined_call_operand.vmem [shape: f32[2,32,256], index: 8, kind: output, shape index: {0}]
  %s9 = inlined_call_operand.vmem [shape: f32[2,32,256], index: 9, kind: output, shape index: {1}]
  %10 = xla_tuple %s8, %s9
  %s11 = sld [smem:[#allocation0]]
  $region153: #{_lambda_.1} parent=0
    _
  %s13 = ssub.s32 1, %s11
  %s14 = scalar_select 0, %s13, %s11
  $region1: #{_lambda_.1} parent=0
    #allocation6 [shape = 'u8[32768]{0}', space=vmem, size = 0x8000, scoped, tag = 'input window, operand 1']
    #allocation7 [shape = 'u8[32768]{0}', space=vmem, size = 0x8000, scoped, tag = 'output window, operand 1']
    loop: start=0, step=1, limit=6
    $region2: #{_lambda_.1} parent=1 // loop_pre_header
      _
    $region3: #{_lambda_.1} parent=1 // loop_header
      %s16 = sphi 0, %s20
      %p17 = scmp.ge.s32.totalorder %s16, 6
      %s23 = sphi 0, %s35
      %s24 = sphi 0, %s31
      %s25 = sphi 0, %s23
      %s26 = sphi 0, %s24
      %s27 = sphi 0, %s25
      %s28 = sphi 0, %s26
      %s38 = sphi 0, %s40
      %s41 = sphi 0, %s38
      %s42 = sphi 0, %s41
      %s58 = sphi 0, %s42
      %s66 = sphi 0, %s68
      %s69 = sphi 0, %s66
      %s70 = sphi 0, %s69
      %s86 = sphi 0, %s70
      %s90 = sphi 0, %s90
      %s92 = sphi 0, %s90
      %s93 = sphi 0, %s92
      %s107 = sphi 0, %s93
      %s111 = sphi 0, %s111
      %s113 = sphi 0, %s111
      %s114 = sphi 0, %s113
      %s128 = sphi 0, %s114
      %s132 = sphi 0, %s132
      %s134 = sphi 0, %s132
      %s135 = sphi 0, %s134
      %s149 = sphi 0, %s135
      %s153 = sphi 0, %s153
      %s155 = sphi 0, %s153
      %s156 = sphi 0, %s155
      %s170 = sphi 0, %s156
      %s174 = sphi 0, %s174
      %s176 = sphi 0, %s174
      %s177 = sphi 0, %s176
      %s191 = sphi 0, %s177
      %s195 = sphi 0, %s195
      %s197 = sphi 0, %s195
      %s198 = sphi 0, %s197
      %s212 = sphi 0, %s198
      %s218 = sphi 0, %s220
      %s221 = sphi 0, %s218
      %s222 = sphi 0, %s221
      %s238 = sphi 0, %s222
      %s246 = sphi 0, %s248
      %s249 = sphi 0, %s246
      %s250 = sphi 0, %s249
      %s266 = sphi 0, %s250
    $region4: #{_lambda_.1} parent=1 // loop_header_branch
      %19 = sbr.rel (%p17) target = $region8
    $region5: #{_lambda_.1} parent=1 // loop_body
      %s21 = ssub.s32 %s16, 1
      %s22 = ssub.s32 %s16, 2
      %s29 = sadd.s32 1, %s24
      %p30 = scmp.ge.s32.totalorder %s29, 2
      %s31 = scalar_select %p30, 0, %s29
      %s32 = sadd.s32 1, %s23
      %s33 = scalar_select %p30, %s32, %s23
      %p34 = scmp.ge.s32.totalorder %s33, 2
      %s35 = scalar_select %p34, 0, %s33
      %s36 = ssub.s32 %s23, %s35
      %p37 = scmp.eq.s32.totalorder %s36, 0
      %s39 = sadd.s32 %s38, 1
      %s40 = scalar_select %p37, %s38, %s39
      %p43 = pneg %p37
      %p44 = scmp.eq.s32.totalorder %s16, 3
      %p45 = por %p43, %p44
      %p46 = scmp.ne.s32.totalorder %s38, %s41
      %p47 = scmp.eq.s32.totalorder %s16, 0
      %p48 = por %p46, %p47
      %p49 = scmp.ne.s32.totalorder %s38, %s41
      %p50 = scmp.eq.s32.totalorder %s21, 3
      %p51 = por %p49, %p50
      %p52 = scmp.ne.s32.totalorder %s41, %s42
      %p53 = scmp.eq.s32.totalorder %s21, 0
      %p54 = por %p52, %p53
      %p55 = scmp.ne.s32.totalorder %s41, %s42
      %p56 = scmp.eq.s32.totalorder %s22, 3
      %p57 = por %p55, %p56
      %p59 = scmp.ne.s32.totalorder %s42, %s58
      %p60 = scmp.eq.s32.totalorder %s22, 0
      %p61 = por %p59, %p60
      %s62 = ssub.s32 %s23, %s35
      %s63 = ssub.s32 %s24, %s31
      %s64 = sor.u32 %s62, %s63
      %p65 = scmp.eq.s32.totalorder %s64, 0
      %s67 = sadd.s32 %s66, 1
      %s68 = scalar_select %p65, %s66, %s67
      %p71 = pneg %p65
      %p72 = scmp.eq.s32.totalorder %s16, 3
      %p73 = por %p71, %p72
      %p74 = scmp.ne.s32.totalorder %s66, %s69
      %p75 = scmp.eq.s32.totalorder %s16, 0
      %p76 = por %p74, %p75
      %p77 = scmp.ne.s32.totalorder %s66, %s69
      %p78 = scmp.eq.s32.totalorder %s21, 3
      %p79 = por %p77, %p78
      %p80 = scmp.ne.s32.totalorder %s69, %s70
      %p81 = scmp.eq.s32.totalorder %s21, 0
      %p82 = por %p80, %p81
      %p83 = scmp.ne.s32.totalorder %s69, %s70
      %p84 = scmp.eq.s32.totalorder %s22, 3
      %p85 = por %p83, %p84
      %p87 = scmp.ne.s32.totalorder %s70, %s86
      %p88 = scmp.eq.s32.totalorder %s22, 0
      %p89 = por %p87, %p88
      %s91 = sadd.s32 %s90, 1
      %p94 = scmp.eq.s32.totalorder %s16, 3
      %p95 = scmp.ne.s32.totalorder %s90, %s92
      %p96 = scmp.eq.s32.totalorder %s16, 0
      %p97 = por %p95, %p96
      %p98 = scmp.ne.s32.totalorder %s90, %s92
      %p99 = scmp.eq.s32.totalorder %s21, 3
      %p100 = por %p98, %p99
      %p101 = scmp.ne.s32.totalorder %s92, %s93
      %p102 = scmp.eq.s32.totalorder %s21, 0
      %p103 = por %p101, %p102
      %p104 = scmp.ne.s32.totalorder %s92, %s93
      %p105 = scmp.eq.s32.totalorder %s22, 3
      %p106 = por %p104, %p105
      %p108 = scmp.ne.s32.totalorder %s93, %s107
      %p109 = scmp.eq.s32.totalorder %s22, 0
      %p110 = por %p108, %p109
      %s112 = sadd.s32 %s111, 1
      %p115 = scmp.eq.s32.totalorder %s16, 3
      %p116 = scmp.ne.s32.totalorder %s111, %s113
      %p117 = scmp.eq.s32.totalorder %s16, 0
      %p118 = por %p116, %p117
      %p119 = scmp.ne.s32.totalorder %s111, %s113
      %p120 = scmp.eq.s32.totalorder %s21, 3
      %p121 = por %p119, %p120
      %p122 = scmp.ne.s32.totalorder %s113, %s114
      %p123 = scmp.eq.s32.totalorder %s21, 0
      %p124 = por %p122, %p123
      %p125 = scmp.ne.s32.totalorder %s113, %s114
      %p126 = scmp.eq.s32.totalorder %s22, 3
      %p127 = por %p125, %p126
      %p129 = scmp.ne.s32.totalorder %s114, %s128
      %p130 = scmp.eq.s32.totalorder %s22, 0
      %p131 = por %p129, %p130
      %s133 = sadd.s32 %s132, 1
      %p136 = scmp.eq.s32.totalorder %s16, 3
      %p137 = scmp.ne.s32.totalorder %s132, %s134
      %p138 = scmp.eq.s32.totalorder %s16, 0
      %p139 = por %p137, %p138
      %p140 = scmp.ne.s32.totalorder %s132, %s134
      %p141 = scmp.eq.s32.totalorder %s21, 3
      %p142 = por %p140, %p141
      %p143 = scmp.ne.s32.totalorder %s134, %s135
      %p144 = scmp.eq.s32.totalorder %s21, 0
      %p145 = por %p143, %p144
      %p146 = scmp.ne.s32.totalorder %s134, %s135
      %p147 = scmp.eq.s32.totalorder %s22, 3
      %p148 = por %p146, %p147
      %p150 = scmp.ne.s32.totalorder %s135, %s149
      %p151 = scmp.eq.s32.totalorder %s22, 0
      %p152 = por %p150, %p151
      %s154 = sadd.s32 %s153, 1
      %p157 = scmp.eq.s32.totalorder %s16, 3
      %p158 = scmp.ne.s32.totalorder %s153, %s155
      %p159 = scmp.eq.s32.totalorder %s16, 0
      %p160 = por %p158, %p159
      %p161 = scmp.ne.s32.totalorder %s153, %s155
      %p162 = scmp.eq.s32.totalorder %s21, 3
      %p163 = por %p161, %p162
      %p164 = scmp.ne.s32.totalorder %s155, %s156
      %p165 = scmp.eq.s32.totalorder %s21, 0
      %p166 = por %p164, %p165
      %p167 = scmp.ne.s32.totalorder %s155, %s156
      %p168 = scmp.eq.s32.totalorder %s22, 3
      %p169 = por %p167, %p168
      %p171 = scmp.ne.s32.totalorder %s156, %s170
      %p172 = scmp.eq.s32.totalorder %s22, 0
      %p173 = por %p171, %p172
      %s175 = sadd.s32 %s174, 1
      %p178 = scmp.eq.s32.totalorder %s16, 3
      %p179 = scmp.ne.s32.totalorder %s174, %s176
      %p180 = scmp.eq.s32.totalorder %s16, 0
      %p181 = por %p179, %p180
      %p182 = scmp.ne.s32.totalorder %s174, %s176
      %p183 = scmp.eq.s32.totalorder %s21, 3
      %p184 = por %p182, %p183
      %p185 = scmp.ne.s32.totalorder %s176, %s177
      %p186 = scmp.eq.s32.totalorder %s21, 0
      %p187 = por %p185, %p186
      %p188 = scmp.ne.s32.totalorder %s176, %s177
      %p189 = scmp.eq.s32.totalorder %s22, 3
      %p190 = por %p188, %p189
      %p192 = scmp.ne.s32.totalorder %s177, %s191
      %p193 = scmp.eq.s32.totalorder %s22, 0
      %p194 = por %p192, %p193
      %s196 = sadd.s32 %s195, 1
      %p199 = scmp.eq.s32.totalorder %s16, 3
      %p200 = scmp.ne.s32.totalorder %s195, %s197
      %p201 = scmp.eq.s32.totalorder %s16, 0
      %p202 = por %p200, %p201
      %p203 = scmp.ne.s32.totalorder %s195, %s197
      %p204 = scmp.eq.s32.totalorder %s21, 3
      %p205 = por %p203, %p204
      %p206 = scmp.ne.s32.totalorder %s197, %s198
      %p207 = scmp.eq.s32.totalorder %s21, 0
      %p208 = por %p206, %p207
      %p209 = scmp.ne.s32.totalorder %s197, %s198
      %p210 = scmp.eq.s32.totalorder %s22, 3
      %p211 = por %p209, %p210
      %p213 = scmp.ne.s32.totalorder %s198, %s212
      %p214 = scmp.eq.s32.totalorder %s22, 0
      %p215 = por %p213, %p214
      %s216 = ssub.s32 %s23, %s35
      %p217 = scmp.eq.s32.totalorder %s216, 0
      %s219 = sadd.s32 %s218, 1
      %s220 = scalar_select %p217, %s218, %s219
      %p223 = pneg %p217
      %p224 = scmp.eq.s32.totalorder %s16, 3
      %p225 = por %p223, %p224
      %p226 = scmp.ne.s32.totalorder %s218, %s221
      %p227 = scmp.eq.s32.totalorder %s16, 0
      %p228 = por %p226, %p227
      %p229 = scmp.ne.s32.totalorder %s218, %s221
      %p230 = scmp.eq.s32.totalorder %s21, 3
      %p231 = por %p229, %p230
      %p232 = scmp.ne.s32.totalorder %s221, %s222
      %p233 = scmp.eq.s32.totalorder %s21, 0
      %p234 = por %p232, %p233
      %p235 = scmp.ne.s32.totalorder %s221, %s222
      %p236 = scmp.eq.s32.totalorder %s22, 3
      %p237 = por %p235, %p236
      %p239 = scmp.ne.s32.totalorder %s222, %s238
      %p240 = scmp.eq.s32.totalorder %s22, 0
      %p241 = por %p239, %p240
      %s242 = ssub.s32 %s23, %s35
      %s243 = ssub.s32 %s24, %s31
      %s244 = sor.u32 %s242, %s243
      %p245 = scmp.eq.s32.totalorder %s244, 0
      %s247 = sadd.s32 %s246, 1
      %s248 = scalar_select %p245, %s246, %s247
      %p251 = pneg %p245
      %p252 = scmp.eq.s32.totalorder %s16, 3
      %p253 = por %p251, %p252
      %p254 = scmp.ne.s32.totalorder %s246, %s249
      %p255 = scmp.eq.s32.totalorder %s16, 0
      %p256 = por %p254, %p255
      %p257 = scmp.ne.s32.totalorder %s246, %s249
      %p258 = scmp.eq.s32.totalorder %s21, 3
      %p259 = por %p257, %p258
      %p260 = scmp.ne.s32.totalorder %s249, %s250
      %p261 = scmp.eq.s32.totalorder %s21, 0
      %p262 = por %p260, %p261
      %p263 = scmp.ne.s32.totalorder %s249, %s250
      %p264 = scmp.eq.s32.totalorder %s22, 3
      %p265 = por %p263, %p264
      %p267 = scmp.ne.s32.totalorder %s250, %s266
      %p268 = scmp.eq.s32.totalorder %s22, 0
      %p269 = por %p267, %p268
      %p270 = scmp.le.s32.totalorder 1, %s16
      %p271 = scmp.lt.s32.totalorder %s16, 5
      %p272 = pnand %p270, %p271
      %p273 = pneg %p272
      // Predicated region
      $region9: #{_lambda_.1} parent=5 // pred_check
        _
      $region10: #{_lambda_.1} parent=5 // pred_check_branch
        %275 = sbr.rel (%p272) target = $region12
      $region11: #{_lambda_.1} parent=5 // pred_region
        %s276 = ssub.s32 %s16, 1
        // Predicated region
        $region13: #{_lambda_.1} parent=11 // pred_check
          %p277 = pneg %p103
        $region14: #{_lambda_.1} parent=11 // pred_check_branch
          %279 = sbr.rel (%p277) target = $region16
        $region15: #{_lambda_.1} parent=11 // pred_region
          _
        $region16: #{_lambda_.1} parent=11 // pred_fallthru
          _
        // Predicated region
        $region17: #{_lambda_.1} parent=11 // pred_check
          %p280 = pneg %p124
        $region18: #{_lambda_.1} parent=11 // pred_check_branch
          %282 = sbr.rel (%p280) target = $region20
        $region19: #{_lambda_.1} parent=11 // pred_region
          _
        $region20: #{_lambda_.1} parent=11 // pred_fallthru
          _
        // Predicated region
        $region21: #{_lambda_.1} parent=11 // pred_check
          %p283 = pneg %p145
        $region22: #{_lambda_.1} parent=11 // pred_check_branch
          %285 = sbr.rel (%p283) target = $region24
        $region23: #{_lambda_.1} parent=11 // pred_region
          _
        $region24: #{_lambda_.1} parent=11 // pred_fallthru
          _
        // Predicated region
        $region25: #{_lambda_.1} parent=11 // pred_check
          %p286 = pneg %p166
        $region26: #{_lambda_.1} parent=11 // pred_check_branch
          %288 = sbr.rel (%p286) target = $region28
        $region27: #{_lambda_.1} parent=11 // pred_region
          _
        $region28: #{_lambda_.1} parent=11 // pred_fallthru
          _
        // Predicated region
        $region29: #{_lambda_.1} parent=11 // pred_check
          %p289 = pneg %p187
        $region30: #{_lambda_.1} parent=11 // pred_check_branch
          %291 = sbr.rel (%p289) target = $region32
        $region31: #{_lambda_.1} parent=11 // pred_region
          _
        $region32: #{_lambda_.1} parent=11 // pred_fallthru
          _
        // Predicated region
        $region33: #{_lambda_.1} parent=11 // pred_check
          %p292 = pneg %p208
        $region34: #{_lambda_.1} parent=11 // pred_check_branch
          %294 = sbr.rel (%p292) target = $region36
        $region35: #{_lambda_.1} parent=11 // pred_region
          _
        $region36: #{_lambda_.1} parent=11 // pred_fallthru
          _
      $region12: #{_lambda_.1} parent=5 // pred_fallthru
        _
      %p295 = scmp.lt.s32.totalorder %s16, 4
      // Predicated region
      $region37: #{_lambda_.1} parent=5 // pred_check
        %p296 = pneg %p295
      $region38: #{_lambda_.1} parent=5 // pred_check_branch
        %298 = sbr.rel (%p296) target = $region40
      $region39: #{_lambda_.1} parent=5 // pred_region
        // Predicated region
        $region41: #{_lambda_.1} parent=39 // pred_check
          %p299 = pneg %p48
        $region42: #{_lambda_.1} parent=39 // pred_check_branch
          %301 = sbr.rel (%p299) target = $region44
        $region43: #{_lambda_.1} parent=39 // pred_region
          %p302 = scmp.lt.s32.totalorder %s23, 1
          %s303 = scalar_select %p302, %s23, 1
          %s304 = smul.addr %s303, 8
          %s305 = smul.addr %s304, 8
          %s306 = scalar_lea.vmem %s0, %s305
        $region44: #{_lambda_.1} parent=39 // pred_fallthru
          _
        // Predicated region
        $region45: #{_lambda_.1} parent=39 // pred_check
          %p307 = pneg %p76
        $region46: #{_lambda_.1} parent=39 // pred_check_branch
          %309 = sbr.rel (%p307) target = $region48
        $region47: #{_lambda_.1} parent=39 // pred_region
          %s310 = sand.u32 %s66, 1
          %s311 = sand.u32 %s66, 1
          %s312 = smul.addr %s311, 32
          %s313 = scalar_lea.vmem [#allocation6], %s312
          %s314 = smul.addr %s23, 8
          %s315 = sadd.s32 %s24, %s314
          %s316 = smul.addr %s315, 8
          %s317 = scalar_lea.vmem %s1, %s316
          // Predicated region
          $region49: #{_lambda_.1} parent=47 // pred_check
            _
          $region50: #{_lambda_.1} parent=47 // pred_check_branch
            %319 = sbr.rel (0) target = $region52
          $region51: #{_lambda_.1} parent=47 // pred_region
            // Predicated region
            $region53: #{_lambda_.1} parent=51 // pred_check
              _
            $region54: #{_lambda_.1} parent=51 // pred_check_branch
              %321 = sbr.rel (0) target = $region56
            $region55: #{_lambda_.1} parent=51 // pred_region
              // Predicated region
              $region68: #{_lambda_.1} parent=55 // pred_check
                _
              $region69: #{_lambda_.1} parent=55 // pred_check_branch
                %343 = sbr.rel (0) target = $region71
              $region70: #{_lambda_.1} parent=55 // pred_region
                loop: start=0, step=1, limit=1
                $region72: #{_lambda_.1} parent=70 // loop_pre_header
                  _
                $region73: #{_lambda_.1} parent=70 // loop_header
                  %s345 = sphi 0, %s349
                  %p346 = scmp.ge.s32.totalorder %s345, 1
                  %s350 = sphi %s317, %s317
                  %s351 = sphi %s313, %s313
                $region74: #{_lambda_.1} parent=70 // loop_header_branch
                  %348 = sbr.rel (%p346) target = $region78
                $region75: #{_lambda_.1} parent=70 // loop_body
                  %v352 = vld [vmem:[%s350] sm:$0xff]
                  %353 = vst [vmem:[%s351] sm:$0xff] %v352
                  %v354 = vld [vmem:[%s350 + $0x10] sm:$0xff]
                  %355 = vst [vmem:[%s351 + $0x8] sm:$0xff] %v354
                  %v356 = vld [vmem:[%s350 + $0x20] sm:$0xff]
                  %357 = vst [vmem:[%s351 + $0x10] sm:$0xff] %v356
                  %v358 = vld [vmem:[%s350 + $0x30] sm:$0xff]
                  %359 = vst [vmem:[%s351 + $0x18] sm:$0xff] %v358
                $region76: #{_lambda_.1} parent=70 // loop_footer
                  %s349 = sadd.s32 1, %s345
                $region77: #{_lambda_.1} parent=70 // loop_footer_branch
                  %344 = sbr.rel target = $region73
                $region78: #{_lambda_.1} parent=70 // loop_exit
                  _
              $region71: #{_lambda_.1} parent=55 // pred_fallthru
                _
              // Predicated region
              $region79: #{_lambda_.1} parent=55 // pred_check
                _
              $region80: #{_lambda_.1} parent=55 // pred_check_branch
                %361 = sbr.rel target = $region82
              $region81: #{_lambda_.1} parent=55 // pred_region
                _
              $region82: #{_lambda_.1} parent=55 // pred_fallthru
                _
            $region56: #{_lambda_.1} parent=51 // pred_fallthru
              _
            // Predicated region
            $region57: #{_lambda_.1} parent=51 // pred_check
              _
            $region58: #{_lambda_.1} parent=51 // pred_check_branch
              %323 = sbr.rel target = $region60
            $region59: #{_lambda_.1} parent=51 // pred_region
              %s325 = ssub.s32 256, 1
              loop: start=0, step=1, limit=1
              $region61: #{_lambda_.1} parent=59 // loop_pre_header
                _
              $region62: #{_lambda_.1} parent=59 // loop_header
                %s327 = sphi 0, %s331
                %p328 = scmp.ge.s32.totalorder %s327, 1
                %s332 = sphi %s317, %s317
                %s333 = sphi %s313, %s313
              $region63: #{_lambda_.1} parent=59 // loop_header_branch
                %330 = sbr.rel (%p328) target = $region67
              $region64: #{_lambda_.1} parent=59 // loop_body
                %v334 = vld [vmem:[%s332] sm:%s325]
                %335 = vst [vmem:[%s333] sm:%s325] %v334
                %v336 = vld [vmem:[%s332 + $0x10] sm:%s325]
                %337 = vst [vmem:[%s333 + $0x8] sm:%s325] %v336
                %v338 = vld [vmem:[%s332 + $0x20] sm:%s325]
                %339 = vst [vmem:[%s333 + $0x10] sm:%s325] %v338
                %v340 = vld [vmem:[%s332 + $0x30] sm:%s325]
                %341 = vst [vmem:[%s333 + $0x18] sm:%s325] %v340
              $region65: #{_lambda_.1} parent=59 // loop_footer
                %s331 = sadd.s32 1, %s327
              $region66: #{_lambda_.1} parent=59 // loop_footer_branch
                %326 = sbr.rel target = $region62
              $region67: #{_lambda_.1} parent=59 // loop_exit
                _
            $region60: #{_lambda_.1} parent=51 // pred_fallthru
              _
          $region52: #{_lambda_.1} parent=47 // pred_fallthru
            _
          %362 = vnop
        $region48: #{_lambda_.1} parent=39 // pred_fallthru
          _
      $region40: #{_lambda_.1} parent=5 // pred_fallthru
        _
      %p363 = scmp.le.s32.totalorder 1, %s16
      %p364 = scmp.lt.s32.totalorder %s16, 5
      %p365 = pnand %p363, %p364
      %p366 = pneg %p365
      // Predicated region
      $region83: #{_lambda_.1} parent=5 // pred_check
        _
      $region84: #{_lambda_.1} parent=5 // pred_check_branch
        %368 = sbr.rel (%p365) target = $region86
      $region85: #{_lambda_.1} parent=5 // pred_region
        %s369 = ssub.s32 %s16, 1
        %s370 = sand.u32 %s69, 1
        %s371 = sand.u32 %s69, 1
        %s372 = smul.addr %s371, 32
        %s373 = scalar_lea.vmem [#allocation6], %s372
        // Predicated region
        $region87: #{_lambda_.1} parent=85 // pred_check
          %p374 = pneg %p82
        $region88: #{_lambda_.1} parent=85 // pred_check_branch
          %376 = sbr.rel (%p374) target = $region90
        $region89: #{_lambda_.1} parent=85 // pred_region
          _
        $region90: #{_lambda_.1} parent=85 // pred_fallthru
          _
        %p377 = scmp.lt.s32.totalorder %s25, 1
        %s378 = scalar_select %p377, %s25, 1
        %s379 = smul.addr %s378, 8
        %s380 = smul.addr %s379, 8
        %s381 = scalar_lea.vmem %s0, %s380
        %p382 = pneg %p54
        %p383 = pneg %p51
        %s384 = sand.u32 %s69, 1
        %s385 = sand.u32 %s69, 1
        %s386 = smul.addr %s385, 32
        %s387 = scalar_lea.vmem [#allocation6], %s386
        %p388 = pneg %p82
        %p389 = pneg %p79
        %p390 = pneg %p103
        %p391 = pneg %p100
        %p392 = pneg %p124
        %p393 = pneg %p121
        %p394 = pneg %p145
        %p395 = pneg %p142
        %p396 = pneg %p166
        %p397 = pneg %p163
        %p398 = pneg %p187
        %p399 = pneg %p184
        %p400 = pneg %p208
        %p401 = pneg %p205
        %p402 = pneg %p234
        %p403 = pneg %p231
        %p404 = scmp.lt.s32.totalorder %s25, 1
        %s405 = scalar_select %p404, %s25, 1
        %s406 = smul.addr %s405, 8
        %s407 = smul.addr %s406, 8
        %s408 = scalar_lea.vmem %s8, %s407
        %p409 = pneg %p262
        %p410 = pneg %p259
        %s411 = sand.u32 %s249, 1
        %s412 = sand.u32 %s249, 1
        %s413 = smul.addr %s412, 32
        %s414 = scalar_lea.vmem [#allocation7], %s413
        %p415 = scmp.lt.s32.totalorder %s25, 1
        %s416 = scalar_select %p415, %s25, 1
        %s417 = smul.addr %s416, 8
        %s418 = smul.addr %s417, 8
        %s419 = scalar_lea.vmem %s0, %s418
        %p420 = scmp.lt.s32.totalorder %s25, 1
        %s421 = scalar_select %p420, %s25, 1
        %s422 = smul.addr %s421, 8
        %s423 = smul.addr %s422, 8
        %s424 = scalar_lea.vmem %s8, %s423
        %v425 = vld [vmem:[%s419] sm:$0xff]
        %v426 = vld [vmem:[%s419 + $0x8] sm:$0xff]
        %v427 = vld [vmem:[%s419 + $0x10] sm:$0xff]
        %v428 = vld [vmem:[%s419 + $0x18] sm:$0xff]
        %v429 = vld [vmem:[%s419 + $0x20] sm:$0xff]
        %v430 = vld [vmem:[%s419 + $0x28] sm:$0xff]
        %v431 = vld [vmem:[%s419 + $0x30] sm:$0xff]
        %v432 = vld [vmem:[%s419 + $0x38] sm:$0xff]
        %v433 = vld [vmem:[%s373] sm:$0xff]
        %v434 = vld [vmem:[%s373 + $0x8] sm:$0xff]
        %v435 = vld [vmem:[%s373 + $0x10] sm:$0xff]
        %v436 = vld [vmem:[%s373 + $0x18] sm:$0xff]
        %p437 = scmp.eq.s32.totalorder %s26, 0
        // Predicated region
        $region91: #{_lambda_.1} parent=85 // pred_check
          %p438 = pneg %p437
        $region92: #{_lambda_.1} parent=85 // pred_check_branch
          %440 = sbr.rel (%p438) target = $region94
        $region93: #{_lambda_.1} parent=85 // pred_region
          %v441 = vld [vmem:[%s2] sm:$0xff]
          %v442 = vld [vmem:[%s2 + $0x8] sm:$0xff]
          %v443 = vld [vmem:[%s2 + $0x10] sm:$0xff]
          %v444 = vld [vmem:[%s2 + $0x18] sm:$0xff]
          %445 = vxpose.xlu0.b32.start [1/16] %v425, 128
          %446 = vxpose.xlu0.b32.cont [2/16] %v427, 128
          %447 = vxpose.xlu0.b32.cont [3/16] %v429, 128
          %448 = vxpose.xlu0.b32.cont [4/16] %v431, 128
          %449 = vxpose.xlu0.b32.cont [5/16] 0.0, 128
          %450 = vxpose.xlu0.b32.cont [6/16] 0.0, 128
          %451 = vxpose.xlu0.b32.cont [7/16] 0.0, 128
          %452 = vxpose.xlu0.b32.cont [8/16] 0.0, 128
          %453 = vxpose.xlu0.b32.cont [9/16] 0.0, 128
          %454 = vxpose.xlu0.b32.cont [10/16] 0.0, 128
          %455 = vxpose.xlu0.b32.cont [11/16] 0.0, 128
          %456 = vxpose.xlu0.b32.cont [12/16] 0.0, 128
          %457 = vxpose.xlu0.b32.cont [13/16] 0.0, 128
          %458 = vxpose.xlu0.b32.cont [14/16] 0.0, 128
          %459 = vxpose.xlu0.b32.cont [15/16] 0.0, 128
          %460 = vxpose.xlu0.b32.end [16/16] 0.0, 128
          %v461 = vpop.trf.xlu0
          %v462 = vpop.trf.xlu0
          %v463 = vpop.trf.xlu0
          %v464 = vpop.trf.xlu0
          %v465 = vpop.trf.xlu0
          %v466 = vpop.trf.xlu0
          %v467 = vpop.trf.xlu0
          %v468 = vpop.trf.xlu0
          %v469 = vpop.trf.xlu0
          %v470 = vpop.trf.xlu0
          %v471 = vpop.trf.xlu0
          %v472 = vpop.trf.xlu0
          %v473 = vpop.trf.xlu0
          %v474 = vpop.trf.xlu0
          %v475 = vpop.trf.xlu0
          %v476 = vpop.trf.xlu0
          %477 = vxpose.xlu0.b32.start [1/16] %v426, 128
          %478 = vxpose.xlu0.b32.cont [2/16] %v428, 128
          %479 = vxpose.xlu0.b32.cont [3/16] %v430, 128
          %480 = vxpose.xlu0.b32.cont [4/16] %v432, 128
          %481 = vxpose.xlu0.b32.cont [5/16] 0.0, 128
          %482 = vxpose.xlu0.b32.cont [6/16] 0.0, 128
          %483 = vxpose.xlu0.b32.cont [7/16] 0.0, 128
          %484 = vxpose.xlu0.b32.cont [8/16] 0.0, 128
          %485 = vxpose.xlu0.b32.cont [9/16] 0.0, 128
          %486 = vxpose.xlu0.b32.cont [10/16] 0.0, 128
          %487 = vxpose.xlu0.b32.cont [11/16] 0.0, 128
          %488 = vxpose.xlu0.b32.cont [12/16] 0.0, 128
          %489 = vxpose.xlu0.b32.cont [13/16] 0.0, 128
          %490 = vxpose.xlu0.b32.cont [14/16] 0.0, 128
          %491 = vxpose.xlu0.b32.cont [15/16] 0.0, 128
          %492 = vxpose.xlu0.b32.end [16/16] 0.0, 128
          %v493 = vpop.trf.xlu0
          %v494 = vpop.trf.xlu0
          %v495 = vpop.trf.xlu0
          %v496 = vpop.trf.xlu0
          %v497 = vpop.trf.xlu0
          %v498 = vpop.trf.xlu0
          %v499 = vpop.trf.xlu0
          %v500 = vpop.trf.xlu0
          %v501 = vpop.trf.xlu0
          %v502 = vpop.trf.xlu0
          %v503 = vpop.trf.xlu0
          %v504 = vpop.trf.xlu0
          %v505 = vpop.trf.xlu0
          %v506 = vpop.trf.xlu0
          %v507 = vpop.trf.xlu0
          %v508 = vpop.trf.xlu0
          %vm509 = vcmask 261120
          %v511 = vsel %vm509, %v461, 0
          %v514 = vsel %vm509, %v462, 0
          %v517 = vsel %vm509, %v463, 0
          %v520 = vsel %vm509, %v464, 0
          %v523 = vsel %vm509, %v465, 0
          %v526 = vsel %vm509, %v466, 0
          %v529 = vsel %vm509, %v467, 0
          %v532 = vsel %vm509, %v468, 0
          %v535 = vsel %vm509, %v469, 0
          %v538 = vsel %vm509, %v470, 0
          %v541 = vsel %vm509, %v471, 0
          %v544 = vsel %vm509, %v472, 0
          %v547 = vsel %vm509, %v473, 0
          %v550 = vsel %vm509, %v474, 0
          %v553 = vsel %vm509, %v475, 0
          %v556 = vsel %vm509, %v476, 0
          %v559 = vsel %vm509, %v493, 0
          %v562 = vsel %vm509, %v494, 0
          %v565 = vsel %vm509, %v495, 0
          %v568 = vsel %vm509, %v496, 0
          %v571 = vsel %vm509, %v497, 0
          %v574 = vsel %vm509, %v498, 0
          %v577 = vsel %vm509, %v499, 0
          %v580 = vsel %vm509, %v500, 0
          %v583 = vsel %vm509, %v501, 0
          %v586 = vsel %vm509, %v502, 0
          %v589 = vsel %vm509, %v503, 0
          %v592 = vsel %vm509, %v504, 0
          %v595 = vsel %vm509, %v505, 0
          %v598 = vsel %vm509, %v506, 0
          %v601 = vsel %vm509, %v507, 0
          %v604 = vsel %vm509, %v508, 0
          %v607 = vsel %vm509, %v441, 0
          %v610 = vsel %vm509, %v442, 0
          %v613 = vsel %vm509, %v443, 0
          %v616 = vsel %vm509, %v444, 0
          %618 = vmatprep.subr.mxu0 0.0
          %619 = vmatpush1.xpose.msra.mxu0 0.0
          %620 = vmatprep.subr.mxu0 0.0
          %621 = vmatpush1.xpose.msra.mxu0 0.0
          %622 = vmatprep.subr.mxu0 0.0
          %623 = vmatpush1.xpose.msra.mxu0 0.0
          %624 = vmatprep.subr.mxu0 0.0
          %625 = vmatpush1.xpose.msra.mxu0 0.0
          %626 = vmatprep.subr.mxu0 0.0
          %627 = vmatpush1.xpose.msra.mxu0 0.0
          %628 = vmatprep.subr.mxu0 0.0
          %629 = vmatpush1.xpose.msra.mxu0 0.0
          %630 = vmatprep.subr.mxu0 0.0
          %631 = vmatpush1.xpose.msra.mxu0 0.0
          %632 = vmatprep.subr.mxu0 0.0
          %633 = vmatpush1.xpose.msra.mxu0 0.0
          %634 = vmatprep.subr.mxu0 0.0
          %635 = vmatpush1.xpose.msra.mxu0 0.0
          %636 = vmatprep.subr.mxu0 0.0
          %637 = vmatpush1.xpose.msra.mxu0 0.0
          %638 = vmatprep.subr.mxu0 0.0
          %639 = vmatpush1.xpose.msra.mxu0 0.0
          %640 = vmatprep.subr.mxu0 0.0
          %641 = vmatpush1.xpose.msra.mxu0 0.0
          %642 = vmatprep.subr.mxu0 0.0
          %643 = vmatpush1.xpose.msra.mxu0 %v616
          %644 = vmatprep.subr.mxu0 0.0
          %645 = vmatpush1.xpose.msra.mxu0 %v613
          %646 = vmatprep.subr.mxu0 0.0
          %647 = vmatpush1.xpose.msra.mxu0 %v610
          %648 = vmatprep.subr.mxu0 0.0
          %649 = vmatpush1.xpose.msra.mxu0 %v607
          %650 = vmatprep.subr.mxu0 0.0
          %651 = vmatpush2.xpose.msra.mxu0 0.0
          %652 = vmatprep.subr.mxu0 0.0
          %653 = vmatpush2.xpose.msra.mxu0 0.0
          %654 = vmatprep.subr.mxu0 0.0
          %655 = vmatpush2.xpose.msra.mxu0 0.0
          %656 = vmatprep.subr.mxu0 0.0
          %657 = vmatpush2.xpose.msra.mxu0 0.0
          %658 = vmatprep.subr.mxu0 0.0
          %659 = vmatpush2.xpose.msra.mxu0 0.0
          %660 = vmatprep.subr.mxu0 0.0
          %661 = vmatpush2.xpose.msra.mxu0 0.0
          %662 = vmatprep.subr.mxu0 0.0
          %663 = vmatpush2.xpose.msra.mxu0 0.0
          %664 = vmatprep.subr.mxu0 0.0
          %665 = vmatpush2.xpose.msra.mxu0 0.0
          %666 = vmatprep.subr.mxu0 0.0
          %667 = vmatpush2.xpose.msra.mxu0 0.0
          %668 = vmatprep.subr.mxu0 0.0
          %669 = vmatpush2.xpose.msra.mxu0 0.0
          %670 = vmatprep.subr.mxu0 0.0
          %671 = vmatpush2.xpose.msra.mxu0 0.0
          %672 = vmatprep.subr.mxu0 0.0
          %673 = vmatpush2.xpose.msra.mxu0 0.0
          %674 = vmatprep.subr.mxu0 0.0
          %675 = vmatpush2.xpose.msra.mxu0 0.0
          %676 = vmatprep.subr.mxu0 0.0
          %677 = vmatpush2.xpose.msra.mxu0 0.0
          %678 = vmatprep.subr.mxu0 0.0
          %679 = vmatpush2.xpose.msra.mxu0 0.0
          %680 = vmatprep.subr.mxu0 0.0
          %681 = vmatpush2.xpose.msra.mxu0 0.0
          %682 = vmatprep.mubr.f32.mxu0 0.0
          %683 = vmatmul.mubr.f32.gmra.mxu0 %v511
          %v684 = vpop.f32.mrf.mxu0
          %v685 = vadd.f32 0.0, %v684
          %v686 = vpop.f32.mrf.mxu0
          %687 = vmatprep.mubr.f32.mxu0 0.0
          %688 = vmatmul.mubr.f32.gmra.mxu0 %v514
          %v689 = vpop.f32.mrf.mxu0
          %v690 = vadd.f32 0.0, %v689
          %v691 = vpop.f32.mrf.mxu0
          %692 = vmatprep.mubr.f32.mxu0 0.0
          %693 = vmatmul.mubr.f32.gmra.mxu0 %v517
          %v694 = vpop.f32.mrf.mxu0
          %v695 = vadd.f32 0.0, %v694
          %v696 = vpop.f32.mrf.mxu0
          %697 = vmatprep.mubr.f32.mxu0 0.0
          %698 = vmatmul.mubr.f32.gmra.mxu0 %v520
          %v699 = vpop.f32.mrf.mxu0
          %v700 = vadd.f32 0.0, %v699
          %v701 = vpop.f32.mrf.mxu0
          %702 = vmatprep.mubr.f32.mxu0 0.0
          %703 = vmatmul.mubr.f32.gmra.mxu0 %v523
          %v704 = vpop.f32.mrf.mxu0
          %v705 = vadd.f32 0.0, %v704
          %v706 = vpop.f32.mrf.mxu0
          %707 = vmatprep.mubr.f32.mxu0 0.0
          %708 = vmatmul.mubr.f32.gmra.mxu0 %v526
          %v709 = vpop.f32.mrf.mxu0
          %v710 = vadd.f32 0.0, %v709
          %v711 = vpop.f32.mrf.mxu0
          %712 = vmatprep.mubr.f32.mxu0 0.0
          %713 = vmatmul.mubr.f32.gmra.mxu0 %v529
          %v714 = vpop.f32.mrf.mxu0
          %v715 = vadd.f32 0.0, %v714
          %v716 = vpop.f32.mrf.mxu0
          %717 = vmatprep.mubr.f32.mxu0 0.0
          %718 = vmatmul.mubr.f32.gmra.mxu0 %v532
          %v719 = vpop.f32.mrf.mxu0
          %v720 = vadd.f32 0.0, %v719
          %v721 = vpop.f32.mrf.mxu0
          %722 = vmatprep.mubr.f32.mxu0 0.0
          %723 = vmatmul.mubr.f32.gmra.mxu0 %v535
          %v724 = vpop.f32.mrf.mxu0
          %v725 = vadd.f32 0.0, %v724
          %v726 = vpop.f32.mrf.mxu0
          %727 = vmatprep.mubr.f32.mxu0 0.0
          %728 = vmatmul.mubr.f32.gmra.mxu0 %v538
          %v729 = vpop.f32.mrf.mxu0
          %v730 = vadd.f32 0.0, %v729
          %v731 = vpop.f32.mrf.mxu0
          %732 = vmatprep.mubr.f32.mxu0 0.0
          %733 = vmatmul.mubr.f32.gmra.mxu0 %v541
          %v734 = vpop.f32.mrf.mxu0
          %v735 = vadd.f32 0.0, %v734
          %v736 = vpop.f32.mrf.mxu0
          %737 = vmatprep.mubr.f32.mxu0 0.0
          %738 = vmatmul.mubr.f32.gmra.mxu0 %v544
          %v739 = vpop.f32.mrf.mxu0
          %v740 = vadd.f32 0.0, %v739
          %v741 = vpop.f32.mrf.mxu0
          %742 = vmatprep.mubr.f32.mxu0 0.0
          %743 = vmatmul.mubr.f32.gmra.mxu0 %v547
          %v744 = vpop.f32.mrf.mxu0
          %v745 = vadd.f32 0.0, %v744
          %v746 = vpop.f32.mrf.mxu0
          %747 = vmatprep.mubr.f32.mxu0 0.0
          %748 = vmatmul.mubr.f32.gmra.mxu0 %v550
          %v749 = vpop.f32.mrf.mxu0
          %v750 = vadd.f32 0.0, %v749
          %v751 = vpop.f32.mrf.mxu0
          %752 = vmatprep.mubr.f32.mxu0 0.0
          %753 = vmatmul.mubr.f32.gmra.mxu0 %v553
          %v754 = vpop.f32.mrf.mxu0
          %v755 = vadd.f32 0.0, %v754
          %v756 = vpop.f32.mrf.mxu0
          %757 = vmatprep.mubr.f32.mxu0 0.0
          %758 = vmatmul.mubr.f32.gmra.mxu0 %v556
          %v759 = vpop.f32.mrf.mxu0
          %v760 = vadd.f32 0.0, %v759
          %v761 = vpop.f32.mrf.mxu0
          %762 = vmatprep.mubr.f32.mxu0 0.0
          %763 = vmatmul.mubr.f32.gmra.mxu0 %v559
          %v764 = vpop.f32.mrf.mxu0
          %v765 = vadd.f32 0.0, %v764
          %v766 = vpop.f32.mrf.mxu0
          %767 = vmatprep.mubr.f32.mxu0 0.0
          %768 = vmatmul.mubr.f32.gmra.mxu0 %v562
          %v769 = vpop.f32.mrf.mxu0
          %v770 = vadd.f32 0.0, %v769
          %v771 = vpop.f32.mrf.mxu0
          %772 = vmatprep.mubr.f32.mxu0 0.0
          %773 = vmatmul.mubr.f32.gmra.mxu0 %v565
          %v774 = vpop.f32.mrf.mxu0
          %v775 = vadd.f32 0.0, %v774
          %v776 = vpop.f32.mrf.mxu0
          %777 = vmatprep.mubr.f32.mxu0 0.0
          %778 = vmatmul.mubr.f32.gmra.mxu0 %v568
          %v779 = vpop.f32.mrf.mxu0
          %v780 = vadd.f32 0.0, %v779
          %v781 = vpop.f32.mrf.mxu0
          %782 = vmatprep.mubr.f32.mxu0 0.0
          %783 = vmatmul.mubr.f32.gmra.mxu0 %v571
          %v784 = vpop.f32.mrf.mxu0
          %v785 = vadd.f32 0.0, %v784
          %v786 = vpop.f32.mrf.mxu0
          %787 = vmatprep.mubr.f32.mxu0 0.0
          %788 = vmatmul.mubr.f32.gmra.mxu0 %v574
          %v789 = vpop.f32.mrf.mxu0
          %v790 = vadd.f32 0.0, %v789
          %v791 = vpop.f32.mrf.mxu0
          %792 = vmatprep.mubr.f32.mxu0 0.0
          %793 = vmatmul.mubr.f32.gmra.mxu0 %v577
          %v794 = vpop.f32.mrf.mxu0
          %v795 = vadd.f32 0.0, %v794
          %v796 = vpop.f32.mrf.mxu0
          %797 = vmatprep.mubr.f32.mxu0 0.0
          %798 = vmatmul.mubr.f32.gmra.mxu0 %v580
          %v799 = vpop.f32.mrf.mxu0
          %v800 = vadd.f32 0.0, %v799
          %v801 = vpop.f32.mrf.mxu0
          %802 = vmatprep.mubr.f32.mxu0 0.0
          %803 = vmatmul.mubr.f32.gmra.mxu0 %v583
          %v804 = vpop.f32.mrf.mxu0
          %v805 = vadd.f32 0.0, %v804
          %v806 = vpop.f32.mrf.mxu0
          %807 = vmatprep.mubr.f32.mxu0 0.0
          %808 = vmatmul.mubr.f32.gmra.mxu0 %v586
          %v809 = vpop.f32.mrf.mxu0
          %v810 = vadd.f32 0.0, %v809
          %v811 = vpop.f32.mrf.mxu0
          %812 = vmatprep.mubr.f32.mxu0 0.0
          %813 = vmatmul.mubr.f32.gmra.mxu0 %v589
          %v814 = vpop.f32.mrf.mxu0
          %v815 = vadd.f32 0.0, %v814
          %v816 = vpop.f32.mrf.mxu0
          %817 = vmatprep.mubr.f32.mxu0 0.0
          %818 = vmatmul.mubr.f32.gmra.mxu0 %v592
          %v819 = vpop.f32.mrf.mxu0
          %v820 = vadd.f32 0.0, %v819
          %v821 = vpop.f32.mrf.mxu0
          %822 = vmatprep.mubr.f32.mxu0 0.0
          %823 = vmatmul.mubr.f32.gmra.mxu0 %v595
          %v824 = vpop.f32.mrf.mxu0
          %v825 = vadd.f32 0.0, %v824
          %v826 = vpop.f32.mrf.mxu0
          %827 = vmatprep.mubr.f32.mxu0 0.0
          %828 = vmatmul.mubr.f32.gmra.mxu0 %v598
          %v829 = vpop.f32.mrf.mxu0
          %v830 = vadd.f32 0.0, %v829
          %v831 = vpop.f32.mrf.mxu0
          %832 = vmatprep.mubr.f32.mxu0 0.0
          %833 = vmatmul.mubr.f32.gmra.mxu0 %v601
          %v834 = vpop.f32.mrf.mxu0
          %v835 = vadd.f32 0.0, %v834
          %v836 = vpop.f32.mrf.mxu0
          %837 = vmatprep.mubr.f32.mxu0 0.0
          %838 = vmatmul.mubr.f32.gmra.mxu0 %v604
          %v839 = vpop.f32.mrf.mxu0
          %v840 = vadd.f32 0.0, %v839
          %v841 = vpop.f32.mrf.mxu0
          %842 = vdwg.mxu0
          %843 = vst.msk [vmem:[#allocation2] sm:$0xff] %vm509, %v685
          %844 = vst.msk [vmem:[#allocation2 + $0x8] sm:$0xff] %vm509, %v690
          %845 = vst.msk [vmem:[#allocation2 + $0x10] sm:$0xff] %vm509, %v695
          %846 = vst.msk [vmem:[#allocation2 + $0x18] sm:$0xff] %vm509, %v700
          %847 = vst.msk [vmem:[#allocation2 + $0x20] sm:$0xff] %vm509, %v705
          %848 = vst.msk [vmem:[#allocation2 + $0x28] sm:$0xff] %vm509, %v710
          %849 = vst.msk [vmem:[#allocation2 + $0x30] sm:$0xff] %vm509, %v715
          %850 = vst.msk [vmem:[#allocation2 + $0x38] sm:$0xff] %vm509, %v720
          %851 = vst.msk [vmem:[#allocation2 + $0x40] sm:$0xff] %vm509, %v725
          %852 = vst.msk [vmem:[#allocation2 + $0x48] sm:$0xff] %vm509, %v730
          %853 = vst.msk [vmem:[#allocation2 + $0x50] sm:$0xff] %vm509, %v735
          %854 = vst.msk [vmem:[#allocation2 + $0x58] sm:$0xff] %vm509, %v740
          %855 = vst.msk [vmem:[#allocation2 + $0x60] sm:$0xff] %vm509, %v745
          %856 = vst.msk [vmem:[#allocation2 + $0x68] sm:$0xff] %vm509, %v750
          %857 = vst.msk [vmem:[#allocation2 + $0x70] sm:$0xff] %vm509, %v755
          %858 = vst.msk [vmem:[#allocation2 + $0x78] sm:$0xff] %vm509, %v760
          %859 = vst.msk [vmem:[#allocation2 + $0x80] sm:$0xff] %vm509, %v765
          %860 = vst.msk [vmem:[#allocation2 + $0x88] sm:$0xff] %vm509, %v770
          %861 = vst.msk [vmem:[#allocation2 + $0x90] sm:$0xff] %vm509, %v775
          %862 = vst.msk [vmem:[#allocation2 + $0x98] sm:$0xff] %vm509, %v780
          %863 = vst.msk [vmem:[#allocation2 + $0xa0] sm:$0xff] %vm509, %v785
          %864 = vst.msk [vmem:[#allocation2 + $0xa8] sm:$0xff] %vm509, %v790
          %865 = vst.msk [vmem:[#allocation2 + $0xb0] sm:$0xff] %vm509, %v795
          %866 = vst.msk [vmem:[#allocation2 + $0xb8] sm:$0xff] %vm509, %v800
          %867 = vst.msk [vmem:[#allocation2 + $0xc0] sm:$0xff] %vm509, %v805
          %868 = vst.msk [vmem:[#allocation2 + $0xc8] sm:$0xff] %vm509, %v810
          %869 = vst.msk [vmem:[#allocation2 + $0xd0] sm:$0xff] %vm509, %v815
          %870 = vst.msk [vmem:[#allocation2 + $0xd8] sm:$0xff] %vm509, %v820
          %871 = vst.msk [vmem:[#allocation2 + $0xe0] sm:$0xff] %vm509, %v825
          %872 = vst.msk [vmem:[#allocation2 + $0xe8] sm:$0xff] %vm509, %v830
          %873 = vst.msk [vmem:[#allocation2 + $0xf0] sm:$0xff] %vm509, %v835
          %874 = vst.msk [vmem:[#allocation2 + $0xf8] sm:$0xff] %vm509, %v840
          %vm875 = vcmask 0
          %876 = vst.msk [vmem:[#allocation5] sm:$0x1] %vm875, -inf
          %v877 = vlaneseq
          %vm878 = vcmp.ge.s32.totalorder %v877, 0
          %vm879 = vcmp.lt.s32.totalorder %v877, 256
          %vm880 = vmand %vm878, %vm879
          %881 = vst.msk [vmem:[#allocation4] sm:$0x3] %vm880, 0.0
          %882 = vst [vmem:[#allocation3] sm:$0xff] 0.0
          %883 = vst [vmem:[#allocation3 + $0x8] sm:$0xff] 0.0
          %884 = vst [vmem:[#allocation3 + $0x10] sm:$0xff] 0.0
          %885 = vst [vmem:[#allocation3 + $0x18] sm:$0xff] 0.0
          %886 = vst [vmem:[#allocation3 + $0x20] sm:$0xff] 0.0
          %887 = vst [vmem:[#allocation3 + $0x28] sm:$0xff] 0.0
          %888 = vst [vmem:[#allocation3 + $0x30] sm:$0xff] 0.0
          %889 = vst [vmem:[#allocation3 + $0x38] sm:$0xff] 0.0
        $region94: #{_lambda_.1} parent=85 // pred_fallthru
          _
        %v890 = vld [vmem:[#allocation2] sm:$0xff]
        %v891 = vld [vmem:[#allocation2 + $0x8] sm:$0xff]
        %v892 = vld [vmem:[#allocation2 + $0x10] sm:$0xff]
        %v893 = vld [vmem:[#allocation2 + $0x18] sm:$0xff]
        %v894 = vld [vmem:[#allocation2 + $0x20] sm:$0xff]
        %v895 = vld [vmem:[#allocation2 + $0x28] sm:$0xff]
        %v896 = vld [vmem:[#allocation2 + $0x30] sm:$0xff]
        %v897 = vld [vmem:[#allocation2 + $0x38] sm:$0xff]
        %v898 = vld [vmem:[#allocation2 + $0x40] sm:$0xff]
        %v899 = vld [vmem:[#allocation2 + $0x48] sm:$0xff]
        %v900 = vld [vmem:[#allocation2 + $0x50] sm:$0xff]
        %v901 = vld [vmem:[#allocation2 + $0x58] sm:$0xff]
        %v902 = vld [vmem:[#allocation2 + $0x60] sm:$0xff]
        %v903 = vld [vmem:[#allocation2 + $0x68] sm:$0xff]
        %v904 = vld [vmem:[#allocation2 + $0x70] sm:$0xff]
        %v905 = vld [vmem:[#allocation2 + $0x78] sm:$0xff]
        %v906 = vld [vmem:[#allocation2 + $0x80] sm:$0xff]
        %v907 = vld [vmem:[#allocation2 + $0x88] sm:$0xff]
        %v908 = vld [vmem:[#allocation2 + $0x90] sm:$0xff]
        %v909 = vld [vmem:[#allocation2 + $0x98] sm:$0xff]
        %v910 = vld [vmem:[#allocation2 + $0xa0] sm:$0xff]
        %v911 = vld [vmem:[#allocation2 + $0xa8] sm:$0xff]
        %v912 = vld [vmem:[#allocation2 + $0xb0] sm:$0xff]
        %v913 = vld [vmem:[#allocation2 + $0xb8] sm:$0xff]
        %v914 = vld [vmem:[#allocation2 + $0xc0] sm:$0xff]
        %v915 = vld [vmem:[#allocation2 + $0xc8] sm:$0xff]
        %v916 = vld [vmem:[#allocation2 + $0xd0] sm:$0xff]
        %v917 = vld [vmem:[#allocation2 + $0xd8] sm:$0xff]
        %v918 = vld [vmem:[#allocation2 + $0xe0] sm:$0xff]
        %v919 = vld [vmem:[#allocation2 + $0xe8] sm:$0xff]
        %v920 = vld [vmem:[#allocation2 + $0xf0] sm:$0xff]
        %v921 = vld [vmem:[#allocation2 + $0xf8] sm:$0xff]
        %vm922 = vcmask 261120
        %v924 = vsel %vm922, %v890, 0
        %v927 = vsel %vm922, %v891, 0
        %v930 = vsel %vm922, %v892, 0
        %v933 = vsel %vm922, %v893, 0
        %v936 = vsel %vm922, %v894, 0
        %v939 = vsel %vm922, %v895, 0
        %v942 = vsel %vm922, %v896, 0
        %v945 = vsel %vm922, %v897, 0
        %v948 = vsel %vm922, %v898, 0
        %v951 = vsel %vm922, %v899, 0
        %v954 = vsel %vm922, %v900, 0
        %v957 = vsel %vm922, %v901, 0
        %v960 = vsel %vm922, %v902, 0
        %v963 = vsel %vm922, %v903, 0
        %v966 = vsel %vm922, %v904, 0
        %v969 = vsel %vm922, %v905, 0
        %v972 = vsel %vm922, %v906, 0
        %v975 = vsel %vm922, %v907, 0
        %v978 = vsel %vm922, %v908, 0
        %v981 = vsel %vm922, %v909, 0
        %v984 = vsel %vm922, %v910, 0
        %v987 = vsel %vm922, %v911, 0
        %v990 = vsel %vm922, %v912, 0
        %v993 = vsel %vm922, %v913, 0
        %v996 = vsel %vm922, %v914, 0
        %v999 = vsel %vm922, %v915, 0
        %v1002 = vsel %vm922, %v916, 0
        %v1005 = vsel %vm922, %v917, 0
        %v1008 = vsel %vm922, %v918, 0
        %v1011 = vsel %vm922, %v919, 0
        %v1014 = vsel %vm922, %v920, 0
        %v1017 = vsel %vm922, %v921, 0
        %1019 = vmatprep.subr.mxu0 0.0
        %1020 = vmatpush1.msra.mxu0 0.0
        %1021 = vmatprep.subr.mxu0 0.0
        %1022 = vmatpush1.msra.mxu0 0.0
        %1023 = vmatprep.subr.mxu0 0.0
        %1024 = vmatpush1.msra.mxu0 0.0
        %1025 = vmatprep.subr.mxu0 0.0
        %1026 = vmatpush1.msra.mxu0 0.0
        %1027 = vmatprep.subr.mxu0 0.0
        %1028 = vmatpush1.msra.mxu0 0.0
        %1029 = vmatprep.subr.mxu0 0.0
        %1030 = vmatpush1.msra.mxu0 0.0
        %1031 = vmatprep.subr.mxu0 0.0
        %1032 = vmatpush1.msra.mxu0 0.0
        %1033 = vmatprep.subr.mxu0 0.0
        %1034 = vmatpush1.msra.mxu0 0.0
        %1035 = vmatprep.subr.mxu0 0.0
        %1036 = vmatpush1.msra.mxu0 0.0
        %1037 = vmatprep.subr.mxu0 0.0
        %1038 = vmatpush1.msra.mxu0 0.0
        %1039 = vmatprep.subr.mxu0 0.0
        %1040 = vmatpush1.msra.mxu0 0.0
        %1041 = vmatprep.subr.mxu0 0.0
        %1042 = vmatpush1.msra.mxu0 0.0
        %1043 = vmatprep.subr.mxu0 0.0
        %1044 = vmatpush1.msra.mxu0 %v436
        %1045 = vmatprep.subr.mxu0 0.0
        %1046 = vmatpush1.msra.mxu0 %v435
        %1047 = vmatprep.subr.mxu0 0.0
        %1048 = vmatpush1.msra.mxu0 %v434
        %1049 = vmatprep.subr.mxu0 0.0
        %1050 = vmatpush1.msra.mxu0 %v433
        %1051 = vmatprep.subr.mxu0 0.0
        %1052 = vmatpush2.msra.mxu0 0.0
        %1053 = vmatprep.subr.mxu0 0.0
        %1054 = vmatpush2.msra.mxu0 0.0
        %1055 = vmatprep.subr.mxu0 0.0
        %1056 = vmatpush2.msra.mxu0 0.0
        %1057 = vmatprep.subr.mxu0 0.0
        %1058 = vmatpush2.msra.mxu0 0.0
        %1059 = vmatprep.subr.mxu0 0.0
        %1060 = vmatpush2.msra.mxu0 0.0
        %1061 = vmatprep.subr.mxu0 0.0
        %1062 = vmatpush2.msra.mxu0 0.0
        %1063 = vmatprep.subr.mxu0 0.0
        %1064 = vmatpush2.msra.mxu0 0.0
        %1065 = vmatprep.subr.mxu0 0.0
        %1066 = vmatpush2.msra.mxu0 0.0
        %1067 = vmatprep.subr.mxu0 0.0
        %1068 = vmatpush2.msra.mxu0 0.0
        %1069 = vmatprep.subr.mxu0 0.0
        %1070 = vmatpush2.msra.mxu0 0.0
        %1071 = vmatprep.subr.mxu0 0.0
        %1072 = vmatpush2.msra.mxu0 0.0
        %1073 = vmatprep.subr.mxu0 0.0
        %1074 = vmatpush2.msra.mxu0 0.0
        %1075 = vmatprep.subr.mxu0 0.0
        %1076 = vmatpush2.msra.mxu0 0.0
        %1077 = vmatprep.subr.mxu0 0.0
        %1078 = vmatpush2.msra.mxu0 0.0
        %1079 = vmatprep.subr.mxu0 0.0
        %1080 = vmatpush2.msra.mxu0 0.0
        %1081 = vmatprep.subr.mxu0 0.0
        %1082 = vmatpush2.msra.mxu0 0.0
        %1083 = vmatprep.mubr.f32.mxu0 0.0
        %1084 = vmatmul.mubr.f32.gmra.mxu0 %v924
        %v1085 = vpop.f32.mrf.mxu0
        %v1086 = vadd.f32 0.0, %v1085
        %v1087 = vpop.f32.mrf.mxu0
        %1088 = vmatprep.mubr.f32.mxu0 0.0
        %1089 = vmatmul.mubr.f32.gmra.mxu0 %v927
        %v1090 = vpop.f32.mrf.mxu0
        %v1091 = vadd.f32 0.0, %v1090
        %v1092 = vpop.f32.mrf.mxu0
        %1093 = vmatprep.mubr.f32.mxu0 0.0
        %1094 = vmatmul.mubr.f32.gmra.mxu0 %v930
        %v1095 = vpop.f32.mrf.mxu0
        %v1096 = vadd.f32 0.0, %v1095
        %v1097 = vpop.f32.mrf.mxu0
        %1098 = vmatprep.mubr.f32.mxu0 0.0
        %1099 = vmatmul.mubr.f32.gmra.mxu0 %v933
        %v1100 = vpop.f32.mrf.mxu0
        %v1101 = vadd.f32 0.0, %v1100
        %v1102 = vpop.f32.mrf.mxu0
        %1103 = vmatprep.mubr.f32.mxu0 0.0
        %1104 = vmatmul.mubr.f32.gmra.mxu0 %v936
        %v1105 = vpop.f32.mrf.mxu0
        %v1106 = vadd.f32 0.0, %v1105
        %v1107 = vpop.f32.mrf.mxu0
        %1108 = vmatprep.mubr.f32.mxu0 0.0
        %1109 = vmatmul.mubr.f32.gmra.mxu0 %v939
        %v1110 = vpop.f32.mrf.mxu0
        %v1111 = vadd.f32 0.0, %v1110
        %v1112 = vpop.f32.mrf.mxu0
        %1113 = vmatprep.mubr.f32.mxu0 0.0
        %1114 = vmatmul.mubr.f32.gmra.mxu0 %v942
        %v1115 = vpop.f32.mrf.mxu0
        %v1116 = vadd.f32 0.0, %v1115
        %v1117 = vpop.f32.mrf.mxu0
        %1118 = vmatprep.mubr.f32.mxu0 0.0
        %1119 = vmatmul.mubr.f32.gmra.mxu0 %v945
        %v1120 = vpop.f32.mrf.mxu0
        %v1121 = vadd.f32 0.0, %v1120
        %v1122 = vpop.f32.mrf.mxu0
        %1123 = vmatprep.mubr.f32.mxu0 0.0
        %1124 = vmatmul.mubr.f32.gmra.mxu0 %v948
        %v1125 = vpop.f32.mrf.mxu0
        %v1126 = vadd.f32 0.0, %v1125
        %v1127 = vpop.f32.mrf.mxu0
        %1128 = vmatprep.mubr.f32.mxu0 0.0
        %1129 = vmatmul.mubr.f32.gmra.mxu0 %v951
        %v1130 = vpop.f32.mrf.mxu0
        %v1131 = vadd.f32 0.0, %v1130
        %v1132 = vpop.f32.mrf.mxu0
        %1133 = vmatprep.mubr.f32.mxu0 0.0
        %1134 = vmatmul.mubr.f32.gmra.mxu0 %v954
        %v1135 = vpop.f32.mrf.mxu0
        %v1136 = vadd.f32 0.0, %v1135
        %v1137 = vpop.f32.mrf.mxu0
        %1138 = vmatprep.mubr.f32.mxu0 0.0
        %1139 = vmatmul.mubr.f32.gmra.mxu0 %v957
        %v1140 = vpop.f32.mrf.mxu0
        %v1141 = vadd.f32 0.0, %v1140
        %v1142 = vpop.f32.mrf.mxu0
        %1143 = vmatprep.mubr.f32.mxu0 0.0
        %1144 = vmatmul.mubr.f32.gmra.mxu0 %v960
        %v1145 = vpop.f32.mrf.mxu0
        %v1146 = vadd.f32 0.0, %v1145
        %v1147 = vpop.f32.mrf.mxu0
        %1148 = vmatprep.mubr.f32.mxu0 0.0
        %1149 = vmatmul.mubr.f32.gmra.mxu0 %v963
        %v1150 = vpop.f32.mrf.mxu0
        %v1151 = vadd.f32 0.0, %v1150
        %v1152 = vpop.f32.mrf.mxu0
        %1153 = vmatprep.mubr.f32.mxu0 0.0
        %1154 = vmatmul.mubr.f32.gmra.mxu0 %v966
        %v1155 = vpop.f32.mrf.mxu0
        %v1156 = vadd.f32 0.0, %v1155
        %v1157 = vpop.f32.mrf.mxu0
        %1158 = vmatprep.mubr.f32.mxu0 0.0
        %1159 = vmatmul.mubr.f32.gmra.mxu0 %v969
        %v1160 = vpop.f32.mrf.mxu0
        %v1161 = vadd.f32 0.0, %v1160
        %v1162 = vpop.f32.mrf.mxu0
        %1163 = vmatprep.mubr.f32.mxu0 0.0
        %1164 = vmatmul.mubr.f32.gmra.mxu0 %v972
        %v1165 = vpop.f32.mrf.mxu0
        %v1166 = vadd.f32 0.0, %v1165
        %v1167 = vpop.f32.mrf.mxu0
        %1168 = vmatprep.mubr.f32.mxu0 0.0
        %1169 = vmatmul.mubr.f32.gmra.mxu0 %v975
        %v1170 = vpop.f32.mrf.mxu0
        %v1171 = vadd.f32 0.0, %v1170
        %v1172 = vpop.f32.mrf.mxu0
        %1173 = vmatprep.mubr.f32.mxu0 0.0
        %1174 = vmatmul.mubr.f32.gmra.mxu0 %v978
        %v1175 = vpop.f32.mrf.mxu0
        %v1176 = vadd.f32 0.0, %v1175
        %v1177 = vpop.f32.mrf.mxu0
        %1178 = vmatprep.mubr.f32.mxu0 0.0
        %1179 = vmatmul.mubr.f32.gmra.mxu0 %v981
        %v1180 = vpop.f32.mrf.mxu0
        %v1181 = vadd.f32 0.0, %v1180
        %v1182 = vpop.f32.mrf.mxu0
        %1183 = vmatprep.mubr.f32.mxu0 0.0
        %1184 = vmatmul.mubr.f32.gmra.mxu0 %v984
        %v1185 = vpop.f32.mrf.mxu0
        %v1186 = vadd.f32 0.0, %v1185
        %v1187 = vpop.f32.mrf.mxu0
        %1188 = vmatprep.mubr.f32.mxu0 0.0
        %1189 = vmatmul.mubr.f32.gmra.mxu0 %v987
        %v1190 = vpop.f32.mrf.mxu0
        %v1191 = vadd.f32 0.0, %v1190
        %v1192 = vpop.f32.mrf.mxu0
        %1193 = vmatprep.mubr.f32.mxu0 0.0
        %1194 = vmatmul.mubr.f32.gmra.mxu0 %v990
        %v1195 = vpop.f32.mrf.mxu0
        %v1196 = vadd.f32 0.0, %v1195
        %v1197 = vpop.f32.mrf.mxu0
        %1198 = vmatprep.mubr.f32.mxu0 0.0
        %1199 = vmatmul.mubr.f32.gmra.mxu0 %v993
        %v1200 = vpop.f32.mrf.mxu0
        %v1201 = vadd.f32 0.0, %v1200
        %v1202 = vpop.f32.mrf.mxu0
        %1203 = vmatprep.mubr.f32.mxu0 0.0
        %1204 = vmatmul.mubr.f32.gmra.mxu0 %v996
        %v1205 = vpop.f32.mrf.mxu0
        %v1206 = vadd.f32 0.0, %v1205
        %v1207 = vpop.f32.mrf.mxu0
        %1208 = vmatprep.mubr.f32.mxu0 0.0
        %1209 = vmatmul.mubr.f32.gmra.mxu0 %v999
        %v1210 = vpop.f32.mrf.mxu0
        %v1211 = vadd.f32 0.0, %v1210
        %v1212 = vpop.f32.mrf.mxu0
        %1213 = vmatprep.mubr.f32.mxu0 0.0
        %1214 = vmatmul.mubr.f32.gmra.mxu0 %v1002
        %v1215 = vpop.f32.mrf.mxu0
        %v1216 = vadd.f32 0.0, %v1215
        %v1217 = vpop.f32.mrf.mxu0
        %1218 = vmatprep.mubr.f32.mxu0 0.0
        %1219 = vmatmul.mubr.f32.gmra.mxu0 %v1005
        %v1220 = vpop.f32.mrf.mxu0
        %v1221 = vadd.f32 0.0, %v1220
        %v1222 = vpop.f32.mrf.mxu0
        %1223 = vmatprep.mubr.f32.mxu0 0.0
        %1224 = vmatmul.mubr.f32.gmra.mxu0 %v1008
        %v1225 = vpop.f32.mrf.mxu0
        %v1226 = vadd.f32 0.0, %v1225
        %v1227 = vpop.f32.mrf.mxu0
        %1228 = vmatprep.mubr.f32.mxu0 0.0
        %1229 = vmatmul.mubr.f32.gmra.mxu0 %v1011
        %v1230 = vpop.f32.mrf.mxu0
        %v1231 = vadd.f32 0.0, %v1230
        %v1232 = vpop.f32.mrf.mxu0
        %1233 = vmatprep.mubr.f32.mxu0 0.0
        %1234 = vmatmul.mubr.f32.gmra.mxu0 %v1014
        %v1235 = vpop.f32.mrf.mxu0
        %v1236 = vadd.f32 0.0, %v1235
        %v1237 = vpop.f32.mrf.mxu0
        %1238 = vmatprep.mubr.f32.mxu0 0.0
        %1239 = vmatmul.mubr.f32.gmra.mxu0 %v1017
        %v1240 = vpop.f32.mrf.mxu0
        %v1241 = vadd.f32 0.0, %v1240
        %v1242 = vpop.f32.mrf.mxu0
        %1243 = vdwg.mxu0
        %v1244 = vld [vmem:[#allocation5] sm:$0x1]
        %1245 = vmax.xlane.f32.xlu0 %v1086
        %v1246 = vpop.xlane.xlu0 %1245
        %1247 = vmax.xlane.f32.xlu0 %v1091
        %v1248 = vpop.xlane.xlu0 %1247
        %1249 = vmax.xlane.f32.xlu0 %v1096
        %v1250 = vpop.xlane.xlu0 %1249
        %1251 = vmax.xlane.f32.xlu0 %v1101
        %v1252 = vpop.xlane.xlu0 %1251
        %1253 = vmax.xlane.f32.xlu0 %v1106
        %v1254 = vpop.xlane.xlu0 %1253
        %1255 = vmax.xlane.f32.xlu0 %v1111
        %v1256 = vpop.xlane.xlu0 %1255
        %1257 = vmax.xlane.f32.xlu0 %v1116
        %v1258 = vpop.xlane.xlu0 %1257
        %1259 = vmax.xlane.f32.xlu0 %v1121
        %v1260 = vpop.xlane.xlu0 %1259
        %1261 = vmax.xlane.f32.xlu0 %v1126
        %v1262 = vpop.xlane.xlu0 %1261
        %1263 = vmax.xlane.f32.xlu0 %v1131
        %v1264 = vpop.xlane.xlu0 %1263
        %1265 = vmax.xlane.f32.xlu0 %v1136
        %v1266 = vpop.xlane.xlu0 %1265
        %1267 = vmax.xlane.f32.xlu0 %v1141
        %v1268 = vpop.xlane.xlu0 %1267
        %1269 = vmax.xlane.f32.xlu0 %v1146
        %v1270 = vpop.xlane.xlu0 %1269
        %1271 = vmax.xlane.f32.xlu0 %v1151
        %v1272 = vpop.xlane.xlu0 %1271
        %1273 = vmax.xlane.f32.xlu0 %v1156
        %v1274 = vpop.xlane.xlu0 %1273
        %1275 = vmax.xlane.f32.xlu0 %v1161
        %v1276 = vpop.xlane.xlu0 %1275
        %1277 = vmax.xlane.f32.xlu0 %v1166
        %v1278 = vpop.xlane.xlu0 %1277
        %1279 = vmax.xlane.f32.xlu0 %v1171
        %v1280 = vpop.xlane.xlu0 %1279
        %1281 = vmax.xlane.f32.xlu0 %v1176
        %v1282 = vpop.xlane.xlu0 %1281
        %1283 = vmax.xlane.f32.xlu0 %v1181
        %v1284 = vpop.xlane.xlu0 %1283
        %1285 = vmax.xlane.f32.xlu0 %v1186
        %v1286 = vpop.xlane.xlu0 %1285
        %1287 = vmax.xlane.f32.xlu0 %v1191
        %v1288 = vpop.xlane.xlu0 %1287
        %1289 = vmax.xlane.f32.xlu0 %v1196
        %v1290 = vpop.xlane.xlu0 %1289
        %1291 = vmax.xlane.f32.xlu0 %v1201
        %v1292 = vpop.xlane.xlu0 %1291
        %1293 = vmax.xlane.f32.xlu0 %v1206
        %v1294 = vpop.xlane.xlu0 %1293
        %1295 = vmax.xlane.f32.xlu0 %v1211
        %v1296 = vpop.xlane.xlu0 %1295
        %1297 = vmax.xlane.f32.xlu0 %v1216
        %v1298 = vpop.xlane.xlu0 %1297
        %1299 = vmax.xlane.f32.xlu0 %v1221
        %v1300 = vpop.xlane.xlu0 %1299
        %1301 = vmax.xlane.f32.xlu0 %v1226
        %v1302 = vpop.xlane.xlu0 %1301
        %1303 = vmax.xlane.f32.xlu0 %v1231
        %v1304 = vpop.xlane.xlu0 %1303
        %1305 = vmax.xlane.f32.xlu0 %v1236
        %v1306 = vpop.xlane.xlu0 %1305
        %1307 = vmax.xlane.f32.xlu0 %v1241
        %v1308 = vpop.xlane.xlu0 %1307
        %v1309 = vmax.f32 %v1246, %v1254
        %v1310 = vmax.f32 %v1248, %v1256
        %v1311 = vmax.f32 %v1250, %v1258
        %v1312 = vmax.f32 %v1252, %v1260
        %v1313 = vmax.f32 %v1309, %v1262
        %v1314 = vmax.f32 %v1310, %v1264
        %v1315 = vmax.f32 %v1311, %v1266
        %v1316 = vmax.f32 %v1312, %v1268
        %v1317 = vmax.f32 %v1313, %v1270
        %v1318 = vmax.f32 %v1314, %v1272
        %v1319 = vmax.f32 %v1315, %v1274
        %v1320 = vmax.f32 %v1316, %v1276
        %v1321 = vmax.f32 %v1317, %v1278
        %v1322 = vmax.f32 %v1318, %v1280
        %v1323 = vmax.f32 %v1319, %v1282
        %v1324 = vmax.f32 %v1320, %v1284
        %v1325 = vmax.f32 %v1321, %v1286
        %v1326 = vmax.f32 %v1322, %v1288
        %v1327 = vmax.f32 %v1323, %v1290
        %v1328 = vmax.f32 %v1324, %v1292
        %v1329 = vmax.f32 %v1325, %v1294
        %v1330 = vmax.f32 %v1326, %v1296
        %v1331 = vmax.f32 %v1327, %v1298
        %v1332 = vmax.f32 %v1328, %v1300
        %v1333 = vmax.f32 %v1329, %v1302
        %v1334 = vmax.f32 %v1330, %v1304
        %v1335 = vmax.f32 %v1331, %v1306
        %v1336 = vmax.f32 %v1332, %v1308
        %v1337 = vmax.f32 %v1333, %v1334
        %v1338 = vmax.f32 %v1335, %v1336
        %v1339 = vmax.f32 %v1337, %v1338
        %v1340 = vrot.slane %v1339, 4
        %v1341 = vmax.f32 %v1339, %v1340
        %v1342 = vrot.slane %v1341, 2
        %v1343 = vmax.f32 %v1341, %v1342
        %v1344 = vrot.slane %v1343, 1
        %v1345 = vmax.f32 %v1343, %v1344
        %v1346 = vmax.f32 %v1244, %v1345
        %v1347 = vsub.f32 %v1244, %v1346
        %v1348 = vmul.f32 %v1347, 1.442695
        %v1349 = vpow.pop %v1348
        %v1351 = vlaneseq
        %v1352 = vshrl.u32 %v1351, 7
        %v1353 = vsub.s32 0, %v1352
        %v1354 = vrot.slane %v1346, %v1353
        %1355 = vset.pattern.permute.xlu0 0
        %1356 = vperm.xlu0 %1355, %v1354
        %v1357 = vpop.permute.xlu0 %1356
        %v1359 = vsub.f32 %v1086, %v1357
        %v1360 = vsub.f32 %v1091, %v1357
        %v1361 = vsub.f32 %v1096, %v1357
        %v1362 = vsub.f32 %v1101, %v1357
        %v1363 = vsub.f32 %v1106, %v1357
        %v1364 = vsub.f32 %v1111, %v1357
        %v1365 = vsub.f32 %v1116, %v1357
        %v1366 = vsub.f32 %v1121, %v1357
        %v1367 = vsub.f32 %v1126, %v1357
        %v1368 = vsub.f32 %v1131, %v1357
        %v1369 = vsub.f32 %v1136, %v1357
        %v1370 = vsub.f32 %v1141, %v1357
        %v1371 = vsub.f32 %v1146, %v1357
        %v1372 = vsub.f32 %v1151, %v1357
        %v1373 = vsub.f32 %v1156, %v1357
        %v1374 = vsub.f32 %v1161, %v1357
        %v1375 = vsub.f32 %v1166, %v1357
        %v1376 = vsub.f32 %v1171, %v1357
        %v1377 = vsub.f32 %v1176, %v1357
        %v1378 = vsub.f32 %v1181, %v1357
        %v1379 = vsub.f32 %v1186, %v1357
        %v1380 = vsub.f32 %v1191, %v1357
        %v1381 = vsub.f32 %v1196, %v1357
        %v1382 = vsub.f32 %v1201, %v1357
        %v1383 = vsub.f32 %v1206, %v1357
        %v1384 = vsub.f32 %v1211, %v1357
        %v1385 = vsub.f32 %v1216, %v1357
        %v1386 = vsub.f32 %v1221, %v1357
        %v1387 = vsub.f32 %v1226, %v1357
        %v1388 = vsub.f32 %v1231, %v1357
        %v1389 = vsub.f32 %v1236, %v1357
        %v1390 = vsub.f32 %v1241, %v1357
        %v1391 = vmul.f32 %v1359, 1.442695
        %v1392 = vpow.pop %v1391
        %v1393 = vmul.f32 %v1360, 1.442695
        %v1394 = vpow.pop %v1393
        %v1395 = vmul.f32 %v1361, 1.442695
        %v1396 = vpow.pop %v1395
        %v1397 = vmul.f32 %v1362, 1.442695
        %v1398 = vpow.pop %v1397
        %v1399 = vmul.f32 %v1363, 1.442695
        %v1400 = vpow.pop %v1399
        %v1401 = vmul.f32 %v1364, 1.442695
        %v1402 = vpow.pop %v1401
        %v1403 = vmul.f32 %v1365, 1.442695
        %v1404 = vpow.pop %v1403
        %v1405 = vmul.f32 %v1366, 1.442695
        %v1406 = vpow.pop %v1405
        %v1407 = vmul.f32 %v1367, 1.442695
        %v1408 = vpow.pop %v1407
        %v1409 = vmul.f32 %v1368, 1.442695
        %v1410 = vpow.pop %v1409
        %v1411 = vmul.f32 %v1369, 1.442695
        %v1412 = vpow.pop %v1411
        %v1413 = vmul.f32 %v1370, 1.442695
        %v1414 = vpow.pop %v1413
        %v1415 = vmul.f32 %v1371, 1.442695
        %v1416 = vpow.pop %v1415
        %v1417 = vmul.f32 %v1372, 1.442695
        %v1418 = vpow.pop %v1417
        %v1419 = vmul.f32 %v1373, 1.442695
        %v1420 = vpow.pop %v1419
        %v1421 = vmul.f32 %v1374, 1.442695
        %v1422 = vpow.pop %v1421
        %v1423 = vmul.f32 %v1375, 1.442695
        %v1424 = vpow.pop %v1423
        %v1425 = vmul.f32 %v1376, 1.442695
        %v1426 = vpow.pop %v1425
        %v1427 = vmul.f32 %v1377, 1.442695
        %v1428 = vpow.pop %v1427
        %v1429 = vmul.f32 %v1378, 1.442695
        %v1430 = vpow.pop %v1429
        %v1431 = vmul.f32 %v1379, 1.442695
        %v1432 = vpow.pop %v1431
        %v1433 = vmul.f32 %v1380, 1.442695
        %v1434 = vpow.pop %v1433
        %v1435 = vmul.f32 %v1381, 1.442695
        %v1436 = vpow.pop %v1435
        %v1437 = vmul.f32 %v1382, 1.442695
        %v1438 = vpow.pop %v1437
        %v1439 = vmul.f32 %v1383, 1.442695
        %v1440 = vpow.pop %v1439
        %v1441 = vmul.f32 %v1384, 1.442695
        %v1442 = vpow.pop %v1441
        %v1443 = vmul.f32 %v1385, 1.442695
        %v1444 = vpow.pop %v1443
        %v1445 = vmul.f32 %v1386, 1.442695
        %v1446 = vpow.pop %v1445
        %v1447 = vmul.f32 %v1387, 1.442695
        %v1448 = vpow.pop %v1447
        %v1449 = vmul.f32 %v1388, 1.442695
        %v1450 = vpow.pop %v1449
        %v1451 = vmul.f32 %v1389, 1.442695
        %v1452 = vpow.pop %v1451
        %v1453 = vmul.f32 %v1390, 1.442695
        %v1454 = vpow.pop %v1453
        %1455 = vmatprep.subr.mxu0 0.0
        %1456 = vmatpush1.msra.mxu0 %v1422
        %1457 = vmatprep.subr.mxu0 0.0
        %1458 = vmatpush1.msra.mxu0 %v1420
        %1459 = vmatprep.subr.mxu0 0.0
        %1460 = vmatpush1.msra.mxu0 %v1418
        %1461 = vmatprep.subr.mxu0 0.0
        %1462 = vmatpush1.msra.mxu0 %v1416
        %1463 = vmatprep.subr.mxu0 0.0
        %1464 = vmatpush1.msra.mxu0 %v1414
        %1465 = vmatprep.subr.mxu0 0.0
        %1466 = vmatpush1.msra.mxu0 %v1412
        %1467 = vmatprep.subr.mxu0 0.0
        %1468 = vmatpush1.msra.mxu0 %v1410
        %1469 = vmatprep.subr.mxu0 0.0
        %1470 = vmatpush1.msra.mxu0 %v1408
        %1471 = vmatprep.subr.mxu0 0.0
        %1472 = vmatpush1.msra.mxu0 %v1406
        %1473 = vmatprep.subr.mxu0 0.0
        %1474 = vmatpush1.msra.mxu0 %v1404
        %1475 = vmatprep.subr.mxu0 0.0
        %1476 = vmatpush1.msra.mxu0 %v1402
        %1477 = vmatprep.subr.mxu0 0.0
        %1478 = vmatpush1.msra.mxu0 %v1400
        %1479 = vmatprep.subr.mxu0 0.0
        %1480 = vmatpush1.msra.mxu0 %v1398
        %1481 = vmatprep.subr.mxu0 0.0
        %1482 = vmatpush1.msra.mxu0 %v1396
        %1483 = vmatprep.subr.mxu0 0.0
        %1484 = vmatpush1.msra.mxu0 %v1394
        %1485 = vmatprep.subr.mxu0 0.0
        %1486 = vmatpush1.msra.mxu0 %v1392
        %1487 = vmatprep.subr.mxu0 0.0
        %1488 = vmatpush2.msra.mxu0 %v1454
        %1489 = vmatprep.subr.mxu0 0.0
        %1490 = vmatpush2.msra.mxu0 %v1452
        %1491 = vmatprep.subr.mxu0 0.0
        %1492 = vmatpush2.msra.mxu0 %v1450
        %1493 = vmatprep.subr.mxu0 0.0
        %1494 = vmatpush2.msra.mxu0 %v1448
        %1495 = vmatprep.subr.mxu0 0.0
        %1496 = vmatpush2.msra.mxu0 %v1446
        %1497 = vmatprep.subr.mxu0 0.0
        %1498 = vmatpush2.msra.mxu0 %v1444
        %1499 = vmatprep.subr.mxu0 0.0
        %1500 = vmatpush2.msra.mxu0 %v1442
        %1501 = vmatprep.subr.mxu0 0.0
        %1502 = vmatpush2.msra.mxu0 %v1440
        %1503 = vmatprep.subr.mxu0 0.0
        %1504 = vmatpush2.msra.mxu0 %v1438
        %1505 = vmatprep.subr.mxu0 0.0
        %1506 = vmatpush2.msra.mxu0 %v1436
        %1507 = vmatprep.subr.mxu0 0.0
        %1508 = vmatpush2.msra.mxu0 %v1434
        %1509 = vmatprep.subr.mxu0 0.0
        %1510 = vmatpush2.msra.mxu0 %v1432
        %1511 = vmatprep.subr.mxu0 0.0
        %1512 = vmatpush2.msra.mxu0 %v1430
        %1513 = vmatprep.subr.mxu0 0.0
        %1514 = vmatpush2.msra.mxu0 %v1428
        %1515 = vmatprep.subr.mxu0 0.0
        %1516 = vmatpush2.msra.mxu0 %v1426
        %1517 = vmatprep.subr.mxu0 0.0
        %1518 = vmatpush2.msra.mxu0 %v1424
        %1519 = vmatprep.mubr.f32.mxu0 %v426
        %1520 = vmatmul.mubr.f32.gmra.mxu0 %v425
        %v1521 = vpop.f32.mrf.mxu0
        %v1522 = vadd.f32 0.0, %v1521
        %v1523 = vpop.f32.mrf.mxu0
        %1524 = vmatprep.mubr.f32.mxu0 %v428
        %1525 = vmatmul.mubr.f32.gmra.mxu0 %v427
        %v1526 = vpop.f32.mrf.mxu0
        %v1527 = vadd.f32 0.0, %v1526
        %v1528 = vpop.f32.mrf.mxu0
        %1529 = vmatprep.mubr.f32.mxu0 %v430
        %1530 = vmatmul.mubr.f32.gmra.mxu0 %v429
        %v1531 = vpop.f32.mrf.mxu0
        %v1532 = vadd.f32 0.0, %v1531
        %v1533 = vpop.f32.mrf.mxu0
        %1534 = vmatprep.mubr.f32.mxu0 %v432
        %1535 = vmatmul.mubr.f32.gmra.mxu0 %v431
        %v1536 = vpop.f32.mrf.mxu0
        %v1537 = vadd.f32 0.0, %v1536
        %v1538 = vpop.f32.mrf.mxu0
        %1539 = vmatprep.mubr.f32.mxu0 1.0
        %1540 = vmatmul.mubr.f32.gmra.mxu0 1.0
        %v1541 = vpop.f32.mrf.mxu0
        %v1542 = vadd.f32 0.0, %v1541
        %v1543 = vpop.f32.mrf.mxu0
        %1544 = vdwg.mxu0
        %v1545 = vmax.f32 %v1542, 1e-30
        %v1546 = vrcp.pop %v1545
        %v1547 = vlaneseq
        %v1548 = vshrl.u32 %v1547, 7
        %v1549 = vsub.s32 0, %v1548
        %v1550 = vrot.slane %v1546, %v1549
        %v1551 = vmul.f32 %v1522, %v1550
        %v1552 = vmul.f32 %v1527, %v1550
        %v1553 = vmul.f32 %v1532, %v1550
        %v1554 = vmul.f32 %v1537, %v1550
        %v1555 = vld [vmem:[%s3] sm:$0xff]
        %v1556 = vld [vmem:[%s3 + $0x8] sm:$0xff]
        %v1557 = vld [vmem:[%s3 + $0x10] sm:$0xff]
        %v1558 = vld [vmem:[%s3 + $0x18] sm:$0xff]
        %1560 = vset.pattern.permute.xlu0 0
        %1561 = vperm.xlu0 %1560, %v1555
        %v1562 = vpop.permute.xlu0 %1561
        %1565 = vset.pattern.permute.xlu0 0
        %1566 = vperm.xlu0 %1565, %v1556
        %v1567 = vpop.permute.xlu0 %1566
        %1570 = vset.pattern.permute.xlu0 0
        %1571 = vperm.xlu0 %1570, %v1557
        %v1572 = vpop.permute.xlu0 %1571
        %1575 = vset.pattern.permute.xlu0 0
        %1576 = vperm.xlu0 %1575, %v1558
        %v1577 = vpop.permute.xlu0 %1576
        %v1579 = vmul.f32 %v1551, %v1562
        %v1580 = vmul.f32 %v1552, %v1567
        %v1581 = vmul.f32 %v1553, %v1572
        %v1582 = vmul.f32 %v1554, %v1577
        %v1583 = vadd.f32 %v1579, %v1580
        %v1584 = vadd.f32 %v1583, %v1581
        %v1585 = vadd.f32 %v1584, %v1582
        %v1586 = vrot.slane %v1585, 4
        %v1587 = vadd.f32 %v1585, %v1586
        %v1588 = vrot.slane %v1587, 2
        %v1589 = vadd.f32 %v1587, %v1588
        %v1590 = vrot.slane %v1589, 1
        %v1591 = vadd.f32 %v1589, %v1590
        %v1592 = vxor.u32 %v1591, 2147483648
        %v1593 = vmul.f32 %v1592, 1.442695
        %v1594 = vpow.pop %v1593
        %v1595 = vadd.f32 %v1594, 1.0
        %v1596 = vrcp.pop %v1595
        %v1597 = vmul.f32 1.0, %v1596
        %v1598 = vmul.f32 %v1551, %v1597
        %v1599 = vmul.f32 %v1552, %v1597
        %v1600 = vmul.f32 %v1553, %v1597
        %v1601 = vmul.f32 %v1554, %v1597
        %v1602 = vld [vmem:[%s6] sm:$0xff]
        %v1603 = vld [vmem:[%s6 + $0x8] sm:$0xff]
        %v1604 = vld [vmem:[%s6 + $0x10] sm:$0xff]
        %v1605 = vld [vmem:[%s6 + $0x18] sm:$0xff]
        %v1606 = vld [vmem:[%s7] sm:$0xff]
        %v1607 = vld [vmem:[%s7 + $0x8] sm:$0xff]
        %v1608 = vld [vmem:[%s7 + $0x10] sm:$0xff]
        %v1609 = vld [vmem:[%s7 + $0x18] sm:$0xff]
        %v1611 = vsel %vm922, %v1606, 0
        %v1614 = vsel %vm922, %v1607, 0
        %v1617 = vsel %vm922, %v1608, 0
        %v1620 = vsel %vm922, %v1609, 0
        %1622 = vmatprep.subr.mxu0 0.0
        %1623 = vmatpush1.msra.mxu0 0.0
        %1624 = vmatprep.subr.mxu0 0.0
        %1625 = vmatpush1.msra.mxu0 0.0
        %1626 = vmatprep.subr.mxu0 0.0
        %1627 = vmatpush1.msra.mxu0 0.0
        %1628 = vmatprep.subr.mxu0 0.0
        %1629 = vmatpush1.msra.mxu0 0.0
        %1630 = vmatprep.subr.mxu0 0.0
        %1631 = vmatpush1.msra.mxu0 0.0
        %1632 = vmatprep.subr.mxu0 0.0
        %1633 = vmatpush1.msra.mxu0 0.0
        %1634 = vmatprep.subr.mxu0 0.0
        %1635 = vmatpush1.msra.mxu0 0.0
        %1636 = vmatprep.subr.mxu0 0.0
        %1637 = vmatpush1.msra.mxu0 0.0
        %1638 = vmatprep.subr.mxu0 0.0
        %1639 = vmatpush1.msra.mxu0 0.0
        %1640 = vmatprep.subr.mxu0 0.0
        %1641 = vmatpush1.msra.mxu0 0.0
        %1642 = vmatprep.subr.mxu0 0.0
        %1643 = vmatpush1.msra.mxu0 0.0
        %1644 = vmatprep.subr.mxu0 0.0
        %1645 = vmatpush1.msra.mxu0 0.0
        %1646 = vmatprep.subr.mxu0 0.0
        %1647 = vmatpush1.msra.mxu0 %v436
        %1648 = vmatprep.subr.mxu0 0.0
        %1649 = vmatpush1.msra.mxu0 %v435
        %1650 = vmatprep.subr.mxu0 0.0
        %1651 = vmatpush1.msra.mxu0 %v434
        %1652 = vmatprep.subr.mxu0 0.0
        %1653 = vmatpush1.msra.mxu0 %v433
        %1654 = vmatprep.subr.mxu0 0.0
        %1655 = vmatpush2.msra.mxu0 0.0
        %1656 = vmatprep.subr.mxu0 0.0
        %1657 = vmatpush2.msra.mxu0 0.0
        %1658 = vmatprep.subr.mxu0 0.0
        %1659 = vmatpush2.msra.mxu0 0.0
        %1660 = vmatprep.subr.mxu0 0.0
        %1661 = vmatpush2.msra.mxu0 0.0
        %1662 = vmatprep.subr.mxu0 0.0
        %1663 = vmatpush2.msra.mxu0 0.0
        %1664 = vmatprep.subr.mxu0 0.0
        %1665 = vmatpush2.msra.mxu0 0.0
        %1666 = vmatprep.subr.mxu0 0.0
        %1667 = vmatpush2.msra.mxu0 0.0
        %1668 = vmatprep.subr.mxu0 0.0
        %1669 = vmatpush2.msra.mxu0 0.0
        %1670 = vmatprep.subr.mxu0 0.0
        %1671 = vmatpush2.msra.mxu0 0.0
        %1672 = vmatprep.subr.mxu0 0.0
        %1673 = vmatpush2.msra.mxu0 0.0
        %1674 = vmatprep.subr.mxu0 0.0
        %1675 = vmatpush2.msra.mxu0 0.0
        %1676 = vmatprep.subr.mxu0 0.0
        %1677 = vmatpush2.msra.mxu0 0.0
        %1678 = vmatprep.subr.mxu0 0.0
        %1679 = vmatpush2.msra.mxu0 0.0
        %1680 = vmatprep.subr.mxu0 0.0
        %1681 = vmatpush2.msra.mxu0 0.0
        %1682 = vmatprep.subr.mxu0 0.0
        %1683 = vmatpush2.msra.mxu0 0.0
        %1684 = vmatprep.subr.mxu0 0.0
        %1685 = vmatpush2.msra.mxu0 0.0
        %1686 = vmatprep.mubr.f32.mxu0 0.0
        %1687 = vmatmul.mubr.f32.gmra.mxu0 %v1611
        %v1688 = vpop.f32.mrf.mxu0
        %v1689 = vadd.f32 0.0, %v1688
        %v1690 = vpop.f32.mrf.mxu0
        %1691 = vmatprep.mubr.f32.mxu0 0.0
        %1692 = vmatmul.mubr.f32.gmra.mxu0 %v1614
        %v1693 = vpop.f32.mrf.mxu0
        %v1694 = vadd.f32 0.0, %v1693
        %v1695 = vpop.f32.mrf.mxu0
        %1696 = vmatprep.mubr.f32.mxu0 0.0
        %1697 = vmatmul.mubr.f32.gmra.mxu0 %v1617
        %v1698 = vpop.f32.mrf.mxu0
        %v1699 = vadd.f32 0.0, %v1698
        %v1700 = vpop.f32.mrf.mxu0
        %1701 = vmatprep.mubr.f32.mxu0 0.0
        %1702 = vmatmul.mubr.f32.gmra.mxu0 %v1620
        %v1703 = vpop.f32.mrf.mxu0
        %v1704 = vadd.f32 0.0, %v1703
        %v1705 = vpop.f32.mrf.mxu0
        %1706 = vdwg.mxu0
        %v1708 = vsel %vm922, %v1602, 0
        %v1711 = vsel %vm922, %v1603, 0
        %v1714 = vsel %vm922, %v1604, 0
        %v1717 = vsel %vm922, %v1605, 0
        %1719 = vmatprep.subr.mxu0 0.0
        %1720 = vmatpush1.msra.mxu0 0.0
        %1721 = vmatprep.subr.mxu0 0.0
        %1722 = vmatpush1.msra.mxu0 0.0
        %1723 = vmatprep.subr.mxu0 0.0
        %1724 = vmatpush1.msra.mxu0 0.0
        %1725 = vmatprep.subr.mxu0 0.0
        %1726 = vmatpush1.msra.mxu0 0.0
        %1727 = vmatprep.subr.mxu0 0.0
        %1728 = vmatpush1.msra.mxu0 0.0
        %1729 = vmatprep.subr.mxu0 0.0
        %1730 = vmatpush1.msra.mxu0 0.0
        %1731 = vmatprep.subr.mxu0 0.0
        %1732 = vmatpush1.msra.mxu0 0.0
        %1733 = vmatprep.subr.mxu0 0.0
        %1734 = vmatpush1.msra.mxu0 0.0
        %1735 = vmatprep.subr.mxu0 0.0
        %1736 = vmatpush1.msra.mxu0 0.0
        %1737 = vmatprep.subr.mxu0 0.0
        %1738 = vmatpush1.msra.mxu0 0.0
        %1739 = vmatprep.subr.mxu0 0.0
        %1740 = vmatpush1.msra.mxu0 0.0
        %1741 = vmatprep.subr.mxu0 0.0
        %1742 = vmatpush1.msra.mxu0 0.0
        %1743 = vmatprep.subr.mxu0 0.0
        %1744 = vmatpush1.msra.mxu0 %v1601
        %1745 = vmatprep.subr.mxu0 0.0
        %1746 = vmatpush1.msra.mxu0 %v1600
        %1747 = vmatprep.subr.mxu0 0.0
        %1748 = vmatpush1.msra.mxu0 %v1599
        %1749 = vmatprep.subr.mxu0 0.0
        %1750 = vmatpush1.msra.mxu0 %v1598
        %1751 = vmatprep.subr.mxu0 0.0
        %1752 = vmatpush2.msra.mxu0 0.0
        %1753 = vmatprep.subr.mxu0 0.0
        %1754 = vmatpush2.msra.mxu0 0.0
        %1755 = vmatprep.subr.mxu0 0.0
        %1756 = vmatpush2.msra.mxu0 0.0
        %1757 = vmatprep.subr.mxu0 0.0
        %1758 = vmatpush2.msra.mxu0 0.0
        %1759 = vmatprep.subr.mxu0 0.0
        %1760 = vmatpush2.msra.mxu0 0.0
        %1761 = vmatprep.subr.mxu0 0.0
        %1762 = vmatpush2.msra.mxu0 0.0
        %1763 = vmatprep.subr.mxu0 0.0
        %1764 = vmatpush2.msra.mxu0 0.0
        %1765 = vmatprep.subr.mxu0 0.0
        %1766 = vmatpush2.msra.mxu0 0.0
        %1767 = vmatprep.subr.mxu0 0.0
        %1768 = vmatpush2.msra.mxu0 0.0
        %1769 = vmatprep.subr.mxu0 0.0
        %1770 = vmatpush2.msra.mxu0 0.0
        %1771 = vmatprep.subr.mxu0 0.0
        %1772 = vmatpush2.msra.mxu0 0.0
        %1773 = vmatprep.subr.mxu0 0.0
        %1774 = vmatpush2.msra.mxu0 0.0
        %1775 = vmatprep.subr.mxu0 0.0
        %1776 = vmatpush2.msra.mxu0 0.0
        %1777 = vmatprep.subr.mxu0 0.0
        %1778 = vmatpush2.msra.mxu0 0.0
        %1779 = vmatprep.subr.mxu0 0.0
        %1780 = vmatpush2.msra.mxu0 0.0
        %1781 = vmatprep.subr.mxu0 0.0
        %1782 = vmatpush2.msra.mxu0 0.0
        %1783 = vmatprep.mubr.f32.mxu0 0.0
        %1784 = vmatmul.mubr.f32.gmra.mxu0 %v1708
        %v1785 = vpop.f32.mrf.mxu0
        %v1786 = vadd.f32 %v1689, %v1785
        %v1787 = vpop.f32.mrf.mxu0
        %1788 = vmatprep.mubr.f32.mxu0 0.0
        %1789 = vmatmul.mubr.f32.gmra.mxu0 %v1711
        %v1790 = vpop.f32.mrf.mxu0
        %v1791 = vadd.f32 %v1694, %v1790
        %v1792 = vpop.f32.mrf.mxu0
        %1793 = vmatprep.mubr.f32.mxu0 0.0
        %1794 = vmatmul.mubr.f32.gmra.mxu0 %v1714
        %v1795 = vpop.f32.mrf.mxu0
        %v1796 = vadd.f32 %v1699, %v1795
        %v1797 = vpop.f32.mrf.mxu0
        %1798 = vmatprep.mubr.f32.mxu0 0.0
        %1799 = vmatmul.mubr.f32.gmra.mxu0 %v1717
        %v1800 = vpop.f32.mrf.mxu0
        %v1801 = vadd.f32 %v1704, %v1800
        %v1802 = vpop.f32.mrf.mxu0
        %1803 = vdwg.mxu0
        %1804 = vst [vmem:[%s414] sm:$0xff] %v1786
        %1805 = vst [vmem:[%s414 + $0x8] sm:$0xff] %v1791
        %1806 = vst [vmem:[%s414 + $0x10] sm:$0xff] %v1796
        %1807 = vst [vmem:[%s414 + $0x18] sm:$0xff] %v1801
        %1808 = vmatprep.subr.mxu0 0.0
        %1809 = vmatpush1.xpose.msra.mxu0 %v1422
        %1810 = vmatprep.subr.mxu0 0.0
        %1811 = vmatpush1.xpose.msra.mxu0 %v1420
        %1812 = vmatprep.subr.mxu0 0.0
        %1813 = vmatpush1.xpose.msra.mxu0 %v1418
        %1814 = vmatprep.subr.mxu0 0.0
        %1815 = vmatpush1.xpose.msra.mxu0 %v1416
        %1816 = vmatprep.subr.mxu0 0.0
        %1817 = vmatpush1.xpose.msra.mxu0 %v1414
        %1818 = vmatprep.subr.mxu0 0.0
        %1819 = vmatpush1.xpose.msra.mxu0 %v1412
        %1820 = vmatprep.subr.mxu0 0.0
        %1821 = vmatpush1.xpose.msra.mxu0 %v1410
        %1822 = vmatprep.subr.mxu0 0.0
        %1823 = vmatpush1.xpose.msra.mxu0 %v1408
        %1824 = vmatprep.subr.mxu0 0.0
        %1825 = vmatpush1.xpose.msra.mxu0 %v1406
        %1826 = vmatprep.subr.mxu0 0.0
        %1827 = vmatpush1.xpose.msra.mxu0 %v1404
        %1828 = vmatprep.subr.mxu0 0.0
        %1829 = vmatpush1.xpose.msra.mxu0 %v1402
        %1830 = vmatprep.subr.mxu0 0.0
        %1831 = vmatpush1.xpose.msra.mxu0 %v1400
        %1832 = vmatprep.subr.mxu0 0.0
        %1833 = vmatpush1.xpose.msra.mxu0 %v1398
        %1834 = vmatprep.subr.mxu0 0.0
        %1835 = vmatpush1.xpose.msra.mxu0 %v1396
        %1836 = vmatprep.subr.mxu0 0.0
        %1837 = vmatpush1.xpose.msra.mxu0 %v1394
        %1838 = vmatprep.subr.mxu0 0.0
        %1839 = vmatpush1.xpose.msra.mxu0 %v1392
        %1840 = vmatprep.subr.mxu0 0.0
        %1841 = vmatpush2.xpose.msra.mxu0 %v1454
        %1842 = vmatprep.subr.mxu0 0.0
        %1843 = vmatpush2.xpose.msra.mxu0 %v1452
        %1844 = vmatprep.subr.mxu0 0.0
        %1845 = vmatpush2.xpose.msra.mxu0 %v1450
        %1846 = vmatprep.subr.mxu0 0.0
        %1847 = vmatpush2.xpose.msra.mxu0 %v1448
        %1848 = vmatprep.subr.mxu0 0.0
        %1849 = vmatpush2.xpose.msra.mxu0 %v1446
        %1850 = vmatprep.subr.mxu0 0.0
        %1851 = vmatpush2.xpose.msra.mxu0 %v1444
        %1852 = vmatprep.subr.mxu0 0.0
        %1853 = vmatpush2.xpose.msra.mxu0 %v1442
        %1854 = vmatprep.subr.mxu0 0.0
        %1855 = vmatpush2.xpose.msra.mxu0 %v1440
        %1856 = vmatprep.subr.mxu0 0.0
        %1857 = vmatpush2.xpose.msra.mxu0 %v1438
        %1858 = vmatprep.subr.mxu0 0.0
        %1859 = vmatpush2.xpose.msra.mxu0 %v1436
        %1860 = vmatprep.subr.mxu0 0.0
        %1861 = vmatpush2.xpose.msra.mxu0 %v1434
        %1862 = vmatprep.subr.mxu0 0.0
        %1863 = vmatpush2.xpose.msra.mxu0 %v1432
        %1864 = vmatprep.subr.mxu0 0.0
        %1865 = vmatpush2.xpose.msra.mxu0 %v1430
        %1866 = vmatprep.subr.mxu0 0.0
        %1867 = vmatpush2.xpose.msra.mxu0 %v1428
        %1868 = vmatprep.subr.mxu0 0.0
        %1869 = vmatpush2.xpose.msra.mxu0 %v1426
        %1870 = vmatprep.subr.mxu0 0.0
        %1871 = vmatpush2.xpose.msra.mxu0 %v1424
        %1872 = vmatprep.mubr.f32.mxu0 0.0
        %1873 = vmatmul.mubr.f32.gmra.mxu0 %v433
        %v1874 = vpop.f32.mrf.mxu0
        %v1875 = vadd.f32 0.0, %v1874
        %v1876 = vpop.f32.mrf.mxu0
        %v1877 = vadd.f32 0.0, %v1876
        %1878 = vmatprep.mubr.f32.mxu0 0.0
        %1879 = vmatmul.mubr.f32.gmra.mxu0 %v434
        %v1880 = vpop.f32.mrf.mxu0
        %v1881 = vadd.f32 0.0, %v1880
        %v1882 = vpop.f32.mrf.mxu0
        %v1883 = vadd.f32 0.0, %v1882
        %1884 = vmatprep.mubr.f32.mxu0 0.0
        %1885 = vmatmul.mubr.f32.gmra.mxu0 %v435
        %v1886 = vpop.f32.mrf.mxu0
        %v1887 = vadd.f32 0.0, %v1886
        %v1888 = vpop.f32.mrf.mxu0
        %v1889 = vadd.f32 0.0, %v1888
        %1890 = vmatprep.mubr.f32.mxu0 0.0
        %1891 = vmatmul.mubr.f32.gmra.mxu0 %v436
        %v1892 = vpop.f32.mrf.mxu0
        %v1893 = vadd.f32 0.0, %v1892
        %v1894 = vpop.f32.mrf.mxu0
        %v1895 = vadd.f32 0.0, %v1894
        %1896 = vmatprep.mubr.f32.mxu0 0.0
        %1897 = vmatmul.mubr.f32.gmra.mxu0 1.0
        %v1898 = vpop.f32.mrf.mxu0
        %v1899 = vadd.f32 0.0, %v1898
        %v1900 = vpop.f32.mrf.mxu0
        %v1901 = vadd.f32 0.0, %v1900
        %1902 = vdwg.mxu0
        %v1903 = vld [vmem:[#allocation4] sm:$0x3]
        %1905 = vset.pattern.permute.xlu0 0
        %1906 = vperm.xlu0 %1905, %v1349
        %v1907 = vpop.permute.xlu0 %1906
        %v1909 = vlaneseq
        %v1910 = vshrl.u32 %v1909, 7
        %v1911 = vsub.s32 0, %v1910
        %v1912 = vrot.slane %v1907, %v1911
        %v1913 = vmul.f32 %v1912, %v1903
        %v1916 = vcombine.low %v1899, %v1901
        %v1918 = vunpack.c.l.s4 1966171168
        %v1919 = vunpack.c.0.s8 %v1918
        %v1920 = vlaneseq
        %v1921 = vshrl.u32 %v1920, 7
        %v1922 = vsub.s32 %v1919, %v1921
        %v1923 = vrot.slane %v1916, %v1922
        %v1925 = vunpack.c.l.s4 1966171168
        %v1926 = vunpack.c.0.s8 %v1925
        %v1927 = vlaneseq
        %v1928 = vshrl.u32 %v1927, 7
        %v1929 = vsub.s32 %v1926, %v1928
        %v1930 = vrot.slane %v1923, %v1929
        %v1932 = vadd.f32 %v1913, %v1930
        %v1933 = vlaneseq
        %vm1934 = vcmp.ge.s32.totalorder %v1933, 0
        %vm1935 = vcmp.lt.s32.totalorder %v1933, 256
        %vm1936 = vmand %vm1934, %vm1935
        %1937 = vst.msk [vmem:[#allocation4] sm:$0x3] %vm1936, %v1932
        %v1938 = vld [vmem:[#allocation3] sm:$0xff]
        %v1939 = vld [vmem:[#allocation3 + $0x8] sm:$0xff]
        %v1940 = vld [vmem:[#allocation3 + $0x10] sm:$0xff]
        %v1941 = vld [vmem:[#allocation3 + $0x18] sm:$0xff]
        %v1942 = vld [vmem:[#allocation3 + $0x20] sm:$0xff]
        %v1943 = vld [vmem:[#allocation3 + $0x28] sm:$0xff]
        %v1944 = vld [vmem:[#allocation3 + $0x30] sm:$0xff]
        %v1945 = vld [vmem:[#allocation3 + $0x38] sm:$0xff]
        %v1946 = vlaneseq
        %v1947 = vshrl.u32 %v1946, 7
        %v1948 = vsub.s32 0, %v1947
        %v1949 = vrot.slane %v1349, %v1948
        %1950 = vset.pattern.permute.xlu0 0
        %1951 = vperm.xlu0 %1950, %v1949
        %v1952 = vpop.permute.xlu0 %1951
        %v1954 = vmul.f32 %v1952, %v1938
        %v1955 = vmul.f32 %v1952, %v1939
        %v1956 = vmul.f32 %v1952, %v1940
        %v1957 = vmul.f32 %v1952, %v1941
        %v1958 = vmul.f32 %v1952, %v1942
        %v1959 = vmul.f32 %v1952, %v1943
        %v1960 = vmul.f32 %v1952, %v1944
        %v1961 = vmul.f32 %v1952, %v1945
        %v1962 = vadd.f32 %v1954, %v1875
        %v1963 = vadd.f32 %v1955, %v1877
        %v1964 = vadd.f32 %v1956, %v1881
        %v1965 = vadd.f32 %v1957, %v1883
        %v1966 = vadd.f32 %v1958, %v1887
        %v1967 = vadd.f32 %v1959, %v1889
        %v1968 = vadd.f32 %v1960, %v1893
        %v1969 = vadd.f32 %v1961, %v1895
        %1970 = vst [vmem:[#allocation3] sm:$0xff] %v1962
        %1971 = vst [vmem:[#allocation3 + $0x8] sm:$0xff] %v1963
        %1972 = vst [vmem:[#allocation3 + $0x10] sm:$0xff] %v1964
        %1973 = vst [vmem:[#allocation3 + $0x18] sm:$0xff] %v1965
        %1974 = vst [vmem:[#allocation3 + $0x20] sm:$0xff] %v1966
        %1975 = vst [vmem:[#allocation3 + $0x28] sm:$0xff] %v1967
        %1976 = vst [vmem:[#allocation3 + $0x30] sm:$0xff] %v1968
        %1977 = vst [vmem:[#allocation3 + $0x38] sm:$0xff] %v1969
        %vm1978 = vcmask 0
        %1979 = vst.msk [vmem:[#allocation5] sm:$0x1] %vm1978, %v1346
        %p1980 = scmp.eq.s32.totalorder %s26, 1
        // Predicated region
        $region95: #{_lambda_.1} parent=85 // pred_check
          %p1981 = pneg %p1980
        $region96: #{_lambda_.1} parent=85 // pred_check_branch
          %1983 = sbr.rel (%p1981) target = $region98
        $region97: #{_lambda_.1} parent=85 // pred_region
          %v1984 = vld [vmem:[#allocation4] sm:$0x3]
          %v1985 = vmax.f32 %v1984, 1e-30
          %v1986 = vld [vmem:[#allocation3] sm:$0xff]
          %v1987 = vld [vmem:[#allocation3 + $0x8] sm:$0xff]
          %v1988 = vld [vmem:[#allocation3 + $0x10] sm:$0xff]
          %v1989 = vld [vmem:[#allocation3 + $0x18] sm:$0xff]
          %v1990 = vld [vmem:[#allocation3 + $0x20] sm:$0xff]
          %v1991 = vld [vmem:[#allocation3 + $0x28] sm:$0xff]
          %v1992 = vld [vmem:[#allocation3 + $0x30] sm:$0xff]
          %v1993 = vld [vmem:[#allocation3 + $0x38] sm:$0xff]
          %v1994 = vrcp.pop %v1985
          %v1996 = vlaneseq
          %v1997 = vshrl.u32 %v1996, 7
          %v1998 = vsub.s32 0, %v1997
          %v1999 = vrot.slane %v1994, %v1998
          %v2000 = vlaneseq
          %v2001 = vshrl.u32 %v2000, 7
          %v2002 = vsub.s32 1, %v2001
          %v2003 = vrot.slane %v1994, %v2002
          %v2006 = vmul.f32 %v1986, %v1999
          %v2007 = vmul.f32 %v1987, %v2003
          %v2008 = vmul.f32 %v1988, %v1999
          %v2009 = vmul.f32 %v1989, %v2003
          %v2010 = vmul.f32 %v1990, %v1999
          %v2011 = vmul.f32 %v1991, %v2003
          %v2012 = vmul.f32 %v1992, %v1999
          %v2013 = vmul.f32 %v1993, %v2003
          %v2014 = vmul.f32 %v2006, %v1562
          %v2015 = vmul.f32 %v2007, %v1562
          %v2016 = vmul.f32 %v2008, %v1567
          %v2017 = vmul.f32 %v2009, %v1567
          %v2018 = vmul.f32 %v2010, %v1572
          %v2019 = vmul.f32 %v2011, %v1572
          %v2020 = vmul.f32 %v2012, %v1577
          %v2021 = vmul.f32 %v2013, %v1577
          %v2022 = vadd.f32 %v2014, %v2016
          %v2023 = vadd.f32 %v2022, %v2018
          %v2024 = vadd.f32 %v2023, %v2020
          %v2025 = vrot.slane %v2024, 4
          %v2026 = vadd.f32 %v2024, %v2025
          %v2027 = vrot.slane %v2026, 2
          %v2028 = vadd.f32 %v2026, %v2027
          %v2029 = vrot.slane %v2028, 1
          %v2030 = vadd.f32 %v2028, %v2029
          %v2031 = vadd.f32 %v2015, %v2017
          %v2032 = vadd.f32 %v2031, %v2019
          %v2033 = vadd.f32 %v2032, %v2021
          %v2034 = vrot.slane %v2033, 4
          %v2035 = vadd.f32 %v2033, %v2034
          %v2036 = vrot.slane %v2035, 2
          %v2037 = vadd.f32 %v2035, %v2036
          %v2038 = vrot.slane %v2037, 1
          %v2039 = vadd.f32 %v2037, %v2038
          %v2040 = vxor.u32 %v2030, 2147483648
          %v2041 = vxor.u32 %v2039, 2147483648
          %v2042 = vmul.f32 %v2040, 1.442695
          %v2043 = vpow.pop %v2042
          %v2044 = vmul.f32 %v2041, 1.442695
          %v2045 = vpow.pop %v2044
          %v2046 = vadd.f32 %v2043, 1.0
          %v2047 = vadd.f32 %v2045, 1.0
          %v2048 = vrcp.pop %v2046
          %v2049 = vmul.f32 1.0, %v2048
          %v2050 = vrcp.pop %v2047
          %v2051 = vmul.f32 1.0, %v2050
          %v2052 = vmul.f32 %v2006, %v2049
          %v2053 = vmul.f32 %v2007, %v2051
          %v2054 = vmul.f32 %v2008, %v2049
          %v2055 = vmul.f32 %v2009, %v2051
          %v2056 = vmul.f32 %v2010, %v2049
          %v2057 = vmul.f32 %v2011, %v2051
          %v2058 = vmul.f32 %v2012, %v2049
          %v2059 = vmul.f32 %v2013, %v2051
          %v2060 = vld [vmem:[%s4] sm:$0xff]
          %v2061 = vld [vmem:[%s4 + $0x8] sm:$0xff]
          %v2062 = vld [vmem:[%s4 + $0x10] sm:$0xff]
          %v2063 = vld [vmem:[%s4 + $0x18] sm:$0xff]
          %v2064 = vld [vmem:[%s5] sm:$0xff]
          %v2065 = vld [vmem:[%s5 + $0x8] sm:$0xff]
          %v2066 = vld [vmem:[%s5 + $0x10] sm:$0xff]
          %v2067 = vld [vmem:[%s5 + $0x18] sm:$0xff]
          %v2069 = vsel %vm922, %v2064, 0
          %v2072 = vsel %vm922, %v2065, 0
          %v2075 = vsel %vm922, %v2066, 0
          %v2078 = vsel %vm922, %v2067, 0
          %2080 = vmatprep.subr.mxu0 0.0
          %2081 = vmatpush1.msra.mxu0 0.0
          %2082 = vmatprep.subr.mxu0 0.0
          %2083 = vmatpush1.msra.mxu0 0.0
          %2084 = vmatprep.subr.mxu0 0.0
          %2085 = vmatpush1.msra.mxu0 0.0
          %2086 = vmatprep.subr.mxu0 0.0
          %2087 = vmatpush1.msra.mxu0 0.0
          %2088 = vmatprep.subr.mxu0 0.0
          %2089 = vmatpush1.msra.mxu0 0.0
          %2090 = vmatprep.subr.mxu0 0.0
          %2091 = vmatpush1.msra.mxu0 0.0
          %2092 = vmatprep.subr.mxu0 0.0
          %2093 = vmatpush1.msra.mxu0 0.0
          %2094 = vmatprep.subr.mxu0 0.0
          %2095 = vmatpush1.msra.mxu0 0.0
          %2096 = vmatprep.subr.mxu0 0.0
          %2097 = vmatpush1.msra.mxu0 0.0
          %2098 = vmatprep.subr.mxu0 0.0
          %2099 = vmatpush1.msra.mxu0 0.0
          %2100 = vmatprep.subr.mxu0 0.0
          %2101 = vmatpush1.msra.mxu0 0.0
          %2102 = vmatprep.subr.mxu0 0.0
          %2103 = vmatpush1.msra.mxu0 0.0
          %2104 = vmatprep.subr.mxu0 %v432
          %2105 = vmatpush1.msra.mxu0 %v431
          %2106 = vmatprep.subr.mxu0 %v430
          %2107 = vmatpush1.msra.mxu0 %v429
          %2108 = vmatprep.subr.mxu0 %v428
          %2109 = vmatpush1.msra.mxu0 %v427
          %2110 = vmatprep.subr.mxu0 %v426
          %2111 = vmatpush1.msra.mxu0 %v425
          %2112 = vmatprep.subr.mxu0 0.0
          %2113 = vmatpush2.msra.mxu0 0.0
          %2114 = vmatprep.subr.mxu0 0.0
          %2115 = vmatpush2.msra.mxu0 0.0
          %2116 = vmatprep.subr.mxu0 0.0
          %2117 = vmatpush2.msra.mxu0 0.0
          %2118 = vmatprep.subr.mxu0 0.0
          %2119 = vmatpush2.msra.mxu0 0.0
          %2120 = vmatprep.subr.mxu0 0.0
          %2121 = vmatpush2.msra.mxu0 0.0
          %2122 = vmatprep.subr.mxu0 0.0
          %2123 = vmatpush2.msra.mxu0 0.0
          %2124 = vmatprep.subr.mxu0 0.0
          %2125 = vmatpush2.msra.mxu0 0.0
          %2126 = vmatprep.subr.mxu0 0.0
          %2127 = vmatpush2.msra.mxu0 0.0
          %2128 = vmatprep.subr.mxu0 0.0
          %2129 = vmatpush2.msra.mxu0 0.0
          %2130 = vmatprep.subr.mxu0 0.0
          %2131 = vmatpush2.msra.mxu0 0.0
          %2132 = vmatprep.subr.mxu0 0.0
          %2133 = vmatpush2.msra.mxu0 0.0
          %2134 = vmatprep.subr.mxu0 0.0
          %2135 = vmatpush2.msra.mxu0 0.0
          %2136 = vmatprep.subr.mxu0 0.0
          %2137 = vmatpush2.msra.mxu0 0.0
          %2138 = vmatprep.subr.mxu0 0.0
          %2139 = vmatpush2.msra.mxu0 0.0
          %2140 = vmatprep.subr.mxu0 0.0
          %2141 = vmatpush2.msra.mxu0 0.0
          %2142 = vmatprep.subr.mxu0 0.0
          %2143 = vmatpush2.msra.mxu0 0.0
          %2144 = vmatprep.mubr.f32.mxu0 0.0
          %2145 = vmatmul.mubr.f32.gmra.mxu0 %v2069
          %v2146 = vpop.f32.mrf.mxu0
          %v2147 = vadd.f32 0.0, %v2146
          %v2148 = vpop.f32.mrf.mxu0
          %v2149 = vadd.f32 0.0, %v2148
          %2150 = vmatprep.mubr.f32.mxu0 0.0
          %2151 = vmatmul.mubr.f32.gmra.mxu0 %v2072
          %v2152 = vpop.f32.mrf.mxu0
          %v2153 = vadd.f32 0.0, %v2152
          %v2154 = vpop.f32.mrf.mxu0
          %v2155 = vadd.f32 0.0, %v2154
          %2156 = vmatprep.mubr.f32.mxu0 0.0
          %2157 = vmatmul.mubr.f32.gmra.mxu0 %v2075
          %v2158 = vpop.f32.mrf.mxu0
          %v2159 = vadd.f32 0.0, %v2158
          %v2160 = vpop.f32.mrf.mxu0
          %v2161 = vadd.f32 0.0, %v2160
          %2162 = vmatprep.mubr.f32.mxu0 0.0
          %2163 = vmatmul.mubr.f32.gmra.mxu0 %v2078
          %v2164 = vpop.f32.mrf.mxu0
          %v2165 = vadd.f32 0.0, %v2164
          %v2166 = vpop.f32.mrf.mxu0
          %v2167 = vadd.f32 0.0, %v2166
          %2168 = vdwg.mxu0
          %v2170 = vsel %vm922, %v2060, 0
          %v2173 = vsel %vm922, %v2061, 0
          %v2176 = vsel %vm922, %v2062, 0
          %v2179 = vsel %vm922, %v2063, 0
          %2181 = vmatprep.subr.mxu0 0.0
          %2182 = vmatpush1.msra.mxu0 0.0
          %2183 = vmatprep.subr.mxu0 0.0
          %2184 = vmatpush1.msra.mxu0 0.0
          %2185 = vmatprep.subr.mxu0 0.0
          %2186 = vmatpush1.msra.mxu0 0.0
          %2187 = vmatprep.subr.mxu0 0.0
          %2188 = vmatpush1.msra.mxu0 0.0
          %2189 = vmatprep.subr.mxu0 0.0
          %2190 = vmatpush1.msra.mxu0 0.0
          %2191 = vmatprep.subr.mxu0 0.0
          %2192 = vmatpush1.msra.mxu0 0.0
          %2193 = vmatprep.subr.mxu0 0.0
          %2194 = vmatpush1.msra.mxu0 0.0
          %2195 = vmatprep.subr.mxu0 0.0
          %2196 = vmatpush1.msra.mxu0 0.0
          %2197 = vmatprep.subr.mxu0 0.0
          %2198 = vmatpush1.msra.mxu0 0.0
          %2199 = vmatprep.subr.mxu0 0.0
          %2200 = vmatpush1.msra.mxu0 0.0
          %2201 = vmatprep.subr.mxu0 0.0
          %2202 = vmatpush1.msra.mxu0 0.0
          %2203 = vmatprep.subr.mxu0 0.0
          %2204 = vmatpush1.msra.mxu0 0.0
          %2205 = vmatprep.subr.mxu0 %v2059
          %2206 = vmatpush1.msra.mxu0 %v2058
          %2207 = vmatprep.subr.mxu0 %v2057
          %2208 = vmatpush1.msra.mxu0 %v2056
          %2209 = vmatprep.subr.mxu0 %v2055
          %2210 = vmatpush1.msra.mxu0 %v2054
          %2211 = vmatprep.subr.mxu0 %v2053
          %2212 = vmatpush1.msra.mxu0 %v2052
          %2213 = vmatprep.subr.mxu0 0.0
          %2214 = vmatpush2.msra.mxu0 0.0
          %2215 = vmatprep.subr.mxu0 0.0
          %2216 = vmatpush2.msra.mxu0 0.0
          %2217 = vmatprep.subr.mxu0 0.0
          %2218 = vmatpush2.msra.mxu0 0.0
          %2219 = vmatprep.subr.mxu0 0.0
          %2220 = vmatpush2.msra.mxu0 0.0
          %2221 = vmatprep.subr.mxu0 0.0
          %2222 = vmatpush2.msra.mxu0 0.0
          %2223 = vmatprep.subr.mxu0 0.0
          %2224 = vmatpush2.msra.mxu0 0.0
          %2225 = vmatprep.subr.mxu0 0.0
          %2226 = vmatpush2.msra.mxu0 0.0
          %2227 = vmatprep.subr.mxu0 0.0
          %2228 = vmatpush2.msra.mxu0 0.0
          %2229 = vmatprep.subr.mxu0 0.0
          %2230 = vmatpush2.msra.mxu0 0.0
          %2231 = vmatprep.subr.mxu0 0.0
          %2232 = vmatpush2.msra.mxu0 0.0
          %2233 = vmatprep.subr.mxu0 0.0
          %2234 = vmatpush2.msra.mxu0 0.0
          %2235 = vmatprep.subr.mxu0 0.0
          %2236 = vmatpush2.msra.mxu0 0.0
          %2237 = vmatprep.subr.mxu0 0.0
          %2238 = vmatpush2.msra.mxu0 0.0
          %2239 = vmatprep.subr.mxu0 0.0
          %2240 = vmatpush2.msra.mxu0 0.0
          %2241 = vmatprep.subr.mxu0 0.0
          %2242 = vmatpush2.msra.mxu0 0.0
          %2243 = vmatprep.subr.mxu0 0.0
          %2244 = vmatpush2.msra.mxu0 0.0
          %2245 = vmatprep.mubr.f32.mxu0 0.0
          %2246 = vmatmul.mubr.f32.gmra.mxu0 %v2170
          %v2247 = vpop.f32.mrf.mxu0
          %v2248 = vadd.f32 %v2147, %v2247
          %v2249 = vpop.f32.mrf.mxu0
          %v2250 = vadd.f32 %v2149, %v2249
          %2251 = vmatprep.mubr.f32.mxu0 0.0
          %2252 = vmatmul.mubr.f32.gmra.mxu0 %v2173
          %v2253 = vpop.f32.mrf.mxu0
          %v2254 = vadd.f32 %v2153, %v2253
          %v2255 = vpop.f32.mrf.mxu0
          %v2256 = vadd.f32 %v2155, %v2255
          %2257 = vmatprep.mubr.f32.mxu0 0.0
          %2258 = vmatmul.mubr.f32.gmra.mxu0 %v2176
          %v2259 = vpop.f32.mrf.mxu0
          %v2260 = vadd.f32 %v2159, %v2259
          %v2261 = vpop.f32.mrf.mxu0
          %v2262 = vadd.f32 %v2161, %v2261
          %2263 = vmatprep.mubr.f32.mxu0 0.0
          %2264 = vmatmul.mubr.f32.gmra.mxu0 %v2179
          %v2265 = vpop.f32.mrf.mxu0
          %v2266 = vadd.f32 %v2165, %v2265
          %v2267 = vpop.f32.mrf.mxu0
          %v2268 = vadd.f32 %v2167, %v2267
          %2269 = vdwg.mxu0
          %2270 = vst [vmem:[%s424] sm:$0xff] %v2248
          %2271 = vst [vmem:[%s424 + $0x8] sm:$0xff] %v2250
          %2272 = vst [vmem:[%s424 + $0x10] sm:$0xff] %v2254
          %2273 = vst [vmem:[%s424 + $0x18] sm:$0xff] %v2256
          %2274 = vst [vmem:[%s424 + $0x20] sm:$0xff] %v2260
          %2275 = vst [vmem:[%s424 + $0x28] sm:$0xff] %v2262
          %2276 = vst [vmem:[%s424 + $0x30] sm:$0xff] %v2266
          %2277 = vst [vmem:[%s424 + $0x38] sm:$0xff] %v2268
        $region98: #{_lambda_.1} parent=85 // pred_fallthru
          _
        %p2278 = scmp.lt.s32.totalorder %s25, 1
        %s2279 = scalar_select %p2278, %s25, 1
        %s2280 = smul.addr %s2279, 8
        %s2281 = smul.addr %s2280, 8
        %s2282 = scalar_lea.vmem %s8, %s2281
        %s2283 = sand.u32 %s249, 1
        %s2284 = sand.u32 %s249, 1
        %s2285 = smul.addr %s2284, 32
        %s2286 = scalar_lea.vmem [#allocation7], %s2285
        // Predicated region
        $region99: #{_lambda_.1} parent=85 // pred_check
          %p2287 = pneg %p231
        $region100: #{_lambda_.1} parent=85 // pred_check_branch
          %2289 = sbr.rel (%p2287) target = $region102
        $region101: #{_lambda_.1} parent=85 // pred_region
          _
        $region102: #{_lambda_.1} parent=85 // pred_fallthru
          _
        // Predicated region
        $region103: #{_lambda_.1} parent=85 // pred_check
          %p2290 = pneg %p259
        $region104: #{_lambda_.1} parent=85 // pred_check_branch
          %2292 = sbr.rel (%p2290) target = $region106
        $region105: #{_lambda_.1} parent=85 // pred_region
          %s2293 = smul.addr %s25, 8
          %s2294 = sadd.s32 %s26, %s2293
          %s2295 = smul.addr %s2294, 8
          %s2296 = scalar_lea.vmem %s9, %s2295
          // Predicated region
          $region107: #{_lambda_.1} parent=105 // pred_check
            _
          $region108: #{_lambda_.1} parent=105 // pred_check_branch
            %2298 = sbr.rel (0) target = $region110
          $region109: #{_lambda_.1} parent=105 // pred_region
            // Predicated region
            $region111: #{_lambda_.1} parent=109 // pred_check
              _
            $region112: #{_lambda_.1} parent=109 // pred_check_branch
              %2300 = sbr.rel (0) target = $region114
            $region113: #{_lambda_.1} parent=109 // pred_region
              // Predicated region
              $region126: #{_lambda_.1} parent=113 // pred_check
                _
              $region127: #{_lambda_.1} parent=113 // pred_check_branch
                %2322 = sbr.rel (0) target = $region129
              $region128: #{_lambda_.1} parent=113 // pred_region
                loop: start=0, step=1, limit=1
                $region130: #{_lambda_.1} parent=128 // loop_pre_header
                  _
                $region131: #{_lambda_.1} parent=128 // loop_header
                  %s2324 = sphi 0, %s2328
                  %p2325 = scmp.ge.s32.totalorder %s2324, 1
                  %s2329 = sphi %s2286, %s2286
                  %s2330 = sphi %s2296, %s2296
                $region132: #{_lambda_.1} parent=128 // loop_header_branch
                  %2327 = sbr.rel (%p2325) target = $region136
                $region133: #{_lambda_.1} parent=128 // loop_body
                  %v2331 = vld [vmem:[%s2329] sm:$0xff]
                  %2332 = vst [vmem:[%s2330] sm:$0xff] %v2331
                  %v2333 = vld [vmem:[%s2329 + $0x8] sm:$0xff]
                  %2334 = vst [vmem:[%s2330 + $0x10] sm:$0xff] %v2333
                  %v2335 = vld [vmem:[%s2329 + $0x10] sm:$0xff]
                  %2336 = vst [vmem:[%s2330 + $0x20] sm:$0xff] %v2335
                  %v2337 = vld [vmem:[%s2329 + $0x18] sm:$0xff]
                  %2338 = vst [vmem:[%s2330 + $0x30] sm:$0xff] %v2337
                $region134: #{_lambda_.1} parent=128 // loop_footer
                  %s2328 = sadd.s32 1, %s2324
                $region135: #{_lambda_.1} parent=128 // loop_footer_branch
                  %2323 = sbr.rel target = $region131
                $region136: #{_lambda_.1} parent=128 // loop_exit
                  _
              $region129: #{_lambda_.1} parent=113 // pred_fallthru
                _
              // Predicated region
              $region137: #{_lambda_.1} parent=113 // pred_check
                _
              $region138: #{_lambda_.1} parent=113 // pred_check_branch
                %2340 = sbr.rel target = $region140
              $region139: #{_lambda_.1} parent=113 // pred_region
                _
              $region140: #{_lambda_.1} parent=113 // pred_fallthru
                _
            $region114: #{_lambda_.1} parent=109 // pred_fallthru
              _
            // Predicated region
            $region115: #{_lambda_.1} parent=109 // pred_check
              _
            $region116: #{_lambda_.1} parent=109 // pred_check_branch
              %2302 = sbr.rel target = $region118
            $region117: #{_lambda_.1} parent=109 // pred_region
              %s2304 = ssub.s32 256, 1
              loop: start=0, step=1, limit=1
              $region119: #{_lambda_.1} parent=117 // loop_pre_header
                _
              $region120: #{_lambda_.1} parent=117 // loop_header
                %s2306 = sphi 0, %s2310
                %p2307 = scmp.ge.s32.totalorder %s2306, 1
                %s2311 = sphi %s2286, %s2286
                %s2312 = sphi %s2296, %s2296
              $region121: #{_lambda_.1} parent=117 // loop_header_branch
                %2309 = sbr.rel (%p2307) target = $region125
              $region122: #{_lambda_.1} parent=117 // loop_body
                %v2313 = vld [vmem:[%s2311] sm:%s2304]
                %2314 = vst [vmem:[%s2312] sm:%s2304] %v2313
                %v2315 = vld [vmem:[%s2311 + $0x8] sm:%s2304]
                %2316 = vst [vmem:[%s2312 + $0x10] sm:%s2304] %v2315
                %v2317 = vld [vmem:[%s2311 + $0x10] sm:%s2304]
                %2318 = vst [vmem:[%s2312 + $0x20] sm:%s2304] %v2317
                %v2319 = vld [vmem:[%s2311 + $0x18] sm:%s2304]
                %2320 = vst [vmem:[%s2312 + $0x30] sm:%s2304] %v2319
              $region123: #{_lambda_.1} parent=117 // loop_footer
                %s2310 = sadd.s32 1, %s2306
              $region124: #{_lambda_.1} parent=117 // loop_footer_branch
                %2305 = sbr.rel target = $region120
              $region125: #{_lambda_.1} parent=117 // loop_exit
                _
            $region118: #{_lambda_.1} parent=109 // pred_fallthru
              _
          $region110: #{_lambda_.1} parent=105 // pred_fallthru
            _
          %2341 = vnop
        $region106: #{_lambda_.1} parent=85 // pred_fallthru
          _
      $region86: #{_lambda_.1} parent=5 // pred_fallthru
        _
      %p2342 = scmp.le.s32.totalorder 2, %s16
      // Predicated region
      $region141: #{_lambda_.1} parent=5 // pred_check
        %p2343 = pneg %p2342
      $region142: #{_lambda_.1} parent=5 // pred_check_branch
        %2345 = sbr.rel (%p2343) target = $region144
      $region143: #{_lambda_.1} parent=5 // pred_region
        %s2346 = ssub.s32 %s16, 2
        // Predicated region
        $region145: #{_lambda_.1} parent=143 // pred_check
          %p2347 = pneg %p237
        $region146: #{_lambda_.1} parent=143 // pred_check_branch
          %2349 = sbr.rel (%p2347) target = $region148
        $region147: #{_lambda_.1} parent=143 // pred_region
          %p2350 = scmp.lt.s32.totalorder %s27, 1
          %s2351 = scalar_select %p2350, %s27, 1
          %s2352 = smul.addr %s2351, 8
          %s2353 = smul.addr %s2352, 8
          %s2354 = scalar_lea.vmem %s8, %s2353
        $region148: #{_lambda_.1} parent=143 // pred_fallthru
          _
        // Predicated region
        $region149: #{_lambda_.1} parent=143 // pred_check
          %p2355 = pneg %p265
        $region150: #{_lambda_.1} parent=143 // pred_check_branch
          %2357 = sbr.rel (%p2355) target = $region152
        $region151: #{_lambda_.1} parent=143 // pred_region
          %s2358 = sand.u32 %s250, 1
          %s2359 = sand.u32 %s250, 1
          %s2360 = smul.addr %s2359, 32
          %s2361 = scalar_lea.vmem [#allocation7], %s2360
        $region152: #{_lambda_.1} parent=143 // pred_fallthru
          _
      $region144: #{_lambda_.1} parent=5 // pred_fallthru
        _
    $region6: #{_lambda_.1} parent=1 // loop_footer
      %s20 = sadd.s32 1, %s16
    $region7: #{_lambda_.1} parent=1 // loop_footer_branch
      %15 = sbr.rel target = $region3
    $region8: #{_lambda_.1} parent=1 // loop_exit
      _

</llo_original>
